<compile_context>
chip_gen: v7x
topology: tpu7x:2x2x1
jax: 0.10.0
libtpu: 0.0.40
codegen_flags: <defaults>
</compile_context>

<pallas_src>
import jax
import jax.numpy as jnp
from jax.experimental import pallas as pl
from jax.experimental.pallas import tpu as pltpu

# ---- model dimensions (EncoderLSTM(input_dim, emb_dim, hidden_dim, n_layers, dropout)) ----
SRC_VOCAB = 16        # input_dim
EMB = 32              # emb_dim
HID = 32              # hidden_dim
N_LAYERS = 1          # n_layers (single layer implemented)
BB = 8                # batch tile per grid step (fills the 8 vreg sublanes)
G = 4 * HID           # compact gate pitch: all 4 gates in one 128-lane block


# ------------------------------ Pallas kernel ------------------------------

def encoder_lstm_kernel(ids_ref, eproj_ref, whh_ref, b_ref,
                        h_out_ref, c_out_ref, xproj_ref):
    """One batch-chunk of the fused EncoderLSTM forward.

    ids_ref   : [src_len*BB, 1] int32  token ids (time-major within the chunk)
    eproj_ref : [VOCAB, 4*HID]  f32    pre-fused  emb @ W_ih^T  table (gate order i|f|g|o)
    whh_ref   : [HID,   4*HID]  bf16   recurrent weights W_hh^T
    b_ref     : [1,     4*HID]  f32    b_ih + b_hh
    outputs   : h_out/c_out [BB, HID] f32
    scratch   : xproj_ref [src_len*BB, 4*HID] f32
    """
    N = ids_ref.shape[0]
    V = eproj_ref.shape[0]
    B = h_out_ref.shape[0]
    H = h_out_ref.shape[1]
    src_len = N // B

    # ---- fused embedding lookup + input projection: exact one-hot MXU gather
    # of the pre-projected table, for ALL timesteps at once.
    # (self.dropout(embedded) is identity in inference mode.)
    ids = ids_ref[...]                                              # [N, 1] int32
    onehot = (jax.lax.broadcasted_iota(jnp.int32, (N, V), 1) == ids)
    onehot = onehot.astype(jnp.float32)
    xproj_ref[...] = jnp.dot(onehot, eproj_ref[...],
                             preferred_element_type=jnp.float32) + b_ref[...]

    # W_hh stays in vregs across the whole recurrence (single load).
    whh = whh_ref[...]                                              # [HID, 4*HID] bf16

    # ---- serial recurrence: only h @ W_hh inside the loop ----
    def step(t, carry):
        h, c = carry                                                # [B, H] f32
        row = pl.multiple_of(t * B, B)                              # sublane-aligned start
        xg = xproj_ref[pl.ds(row, B), :]                            # [B, 4*HID]
        gates = xg + jnp.dot(h.astype(jnp.bfloat16), whh,
                             preferred_element_type=jnp.float32)    # [B, 4*HID]
        i_g = gates[:, 0 * H:1 * H]                                 # 32-lane static slices
        f_g = gates[:, 1 * H:2 * H]
        g_g = gates[:, 2 * H:3 * H]
        o_g = gates[:, 3 * H:4 * H]
        c_new = jax.nn.sigmoid(f_g) * c + jax.nn.sigmoid(i_g) * jnp.tanh(g_g)
        h_new = jax.nn.sigmoid(o_g) * jnp.tanh(c_new)
        return h_new, c_new

    h0 = jnp.zeros((B, H), jnp.float32)
    c0 = jnp.zeros((B, H), jnp.float32)
    # Full unroll only for short sequences (avoid vreg spills / LLO bloat).
    unroll = True if src_len <= 16 else 4
    h_fin, c_fin = jax.lax.fori_loop(0, src_len, step, (h0, c0), unroll=unroll)

    h_out_ref[...] = h_fin
    c_out_ref[...] = c_fin


# ------------------------------ wrapper ------------------------------------

def _encoder_pallas(ids, eproj, whh, b, batch, src_len, n_chunks):
    N = src_len * BB
    # Advisory cost hint: one-hot gather matmul + src_len recurrent matmuls +
    # gate elementwise work, per chunk.
    flops = n_chunks * (2 * N * SRC_VOCAB * G
                        + src_len * (2 * BB * HID * G + 12 * BB * G))
    transcendentals = n_chunks * src_len * BB * 5 * HID
    bytes_accessed = (ids.size * 4 + SRC_VOCAB * G * 4 + HID * G * 2 + G * 4
                      + 2 * batch * HID * 4)
    return pl.pallas_call(
        encoder_lstm_kernel,
        grid=(n_chunks,),
        in_specs=[
            # ids kept [N, 1] per chunk: a (src_len, BB) block would violate the
            # lane-tile constraint; the padded [N,128] DMA is ~32 KiB (negligible).
            pl.BlockSpec((N, 1), lambda c: (c, 0)),
            pl.BlockSpec((SRC_VOCAB, G), lambda c: (0, 0)),
            pl.BlockSpec((HID, G), lambda c: (0, 0)),
            pl.BlockSpec((1, G), lambda c: (0, 0)),
        ],
        out_specs=(
            pl.BlockSpec((BB, HID), lambda c: (c, 0)),
            pl.BlockSpec((BB, HID), lambda c: (c, 0)),
        ),
        out_shape=(jax.ShapeDtypeStruct((batch, HID), jnp.float32),
                   jax.ShapeDtypeStruct((batch, HID), jnp.float32)),
        scratch_shapes=[pltpu.VMEM((N, G), jnp.float32)],
        compiler_params=pltpu.CompilerParams(
            dimension_semantics=("parallel",)),        # v7x: chunks -> both TCs
        cost_estimate=pl.CostEstimate(flops=flops,
                                      transcendentals=transcendentals,
                                      bytes_accessed=bytes_accessed),
    )(ids, eproj, whh, b)


@jax.jit
def encoder_forward(params, src):
    """EncoderLSTM.forward(src) -> (hidden, cell), each [n_layers, B, HID]."""
    src_len, batch = src.shape
    assert batch % BB == 0, "batch must be a multiple of the 8-row batch tile"
    n_chunks = batch // BB
    # chunk-major, time-major-within-chunk flattening of the token ids
    ids = (src.astype(jnp.int32)
              .reshape(src_len, n_chunks, BB)
              .transpose(1, 0, 2)
              .reshape(n_chunks * src_len * BB, 1))
    h, c = _encoder_pallas(ids, params["eproj"], params["whh"], params["b"],
                           batch, src_len, n_chunks)
    return h[None], c[None]                                         # [1, B, HID]


# ------------------------------ parameters ---------------------------------

def init_raw_params(key):
    """PyTorch-convention shapes (gate order i,f,g,o)."""
    ks = jax.random.split(key, 5)
    s = 0.1
    return {
        "emb":  jax.random.normal(ks[0], (SRC_VOCAB, EMB), jnp.float32) * s,
        "w_ih": jax.random.normal(ks[1], (4 * HID, EMB), jnp.float32) * s,
        "w_hh": jax.random.normal(ks[2], (4 * HID, HID), jnp.float32) * s,
        "b_ih": jax.random.normal(ks[3], (4 * HID,), jnp.float32) * s,
        "b_hh": jax.random.normal(ks[4], (4 * HID,), jnp.float32) * s,
    }


def pack_params(raw):
    """Pre-fuse emb @ W_ih^T into one table, pre-transpose W_hh, pre-add biases."""
    emb_bf = raw["emb"].astype(jnp.bfloat16)                        # [VOCAB, EMB]
    wih_t_bf = raw["w_ih"].T.astype(jnp.bfloat16)                   # [EMB, 4*HID]
    eproj = jnp.dot(emb_bf, wih_t_bf,
                    preferred_element_type=jnp.float32)             # [VOCAB, 4*HID] f32
    return {
        "eproj": eproj,                                             # fused embedding+input proj
        "whh":   raw["w_hh"].T.astype(jnp.bfloat16),                # [HID, 4*HID] bf16
        "b":     (raw["b_ih"] + raw["b_hh"]).reshape(1, 4 * HID).astype(jnp.float32),
    }


# --------------------------- pure-JAX reference -----------------------------

def encoder_forward_ref(raw, src):
    emb_t = raw["emb"].astype(jnp.bfloat16).astype(jnp.float32)
    w_ih = raw["w_ih"].astype(jnp.bfloat16).astype(jnp.float32)
    w_hh = raw["w_hh"].astype(jnp.bfloat16).astype(jnp.float32)
    b = raw["b_ih"] + raw["b_hh"]
    src_len, batch = src.shape
    h = jnp.zeros((batch, HID), jnp.float32)
    c = jnp.zeros((batch, HID), jnp.float32)
    for t in range(src_len):
        x = emb_t[src[t]]
        h_bf = h.astype(jnp.bfloat16).astype(jnp.float32)
        gates = x @ w_ih.T + h_bf @ w_hh.T + b
        i, f, g, o = jnp.split(gates, 4, axis=1)
        c = jax.nn.sigmoid(f) * c + jax.nn.sigmoid(i) * jnp.tanh(g)
        h = jax.nn.sigmoid(o) * jnp.tanh(c)
    return h[None], c[None]


# ---------------------------------- main ------------------------------------

if __name__ == "__main__":
    key = jax.random.PRNGKey(0)
    kp, ks = jax.random.split(key)
    raw = init_raw_params(kp)
    params = pack_params(raw)

    src_len, batch = 8, 16         # 2 batch chunks of 8 -> exercises the parallel grid axis
    src = jax.random.randint(ks, (src_len, batch), 0, SRC_VOCAB, dtype=jnp.int32)

    hidden, cell = encoder_forward(params, src)
    hidden, cell = jax.block_until_ready((hidden, cell))
    assert hidden.shape == (N_LAYERS, batch, HID)
    assert cell.shape == (N_LAYERS, batch, HID)

    h_ref, c_ref = encoder_forward_ref(raw, src)
    assert jnp.allclose(hidden, h_ref, atol=1e-2, rtol=1e-2)
    assert jnp.allclose(cell, c_ref, atol=1e-2, rtol=1e-2)

    # TODO(synk): n_layers > 1 (with inter-layer dropout) not implemented; single-layer LSTM only.
    print("KERNEL_OK")
</pallas_src>

<mosaic_0001>
module attributes {stable_mosaic.version = 11 : i64} {
  func.func @encoder_lstm_kernel(%arg0: i32, %arg1: memref<64x1xi32, #tpu.memory_space<vmem>>, %arg2: memref<16x128xf32, #tpu.memory_space<vmem>>, %arg3: memref<32x128xbf16, #tpu.memory_space<vmem>>, %arg4: memref<1x128xf32, #tpu.memory_space<vmem>>, %arg5: memref<8x32xf32, #tpu.memory_space<vmem>>, %arg6: memref<8x32xf32, #tpu.memory_space<vmem>>, %arg7: memref<64x128xf32, #tpu.memory_space<vmem>>) attributes {dimension_semantics = [#tpu.dimension_semantics<parallel>], iteration_bounds = array<i64: 2>, scalar_prefetch = 0 : i64, scratch_operands = 1 : i64, tpu.core_type = #tpu.core_type<tc>, window_params = [{transform_indices = @transform_0, window_bounds = array<i64: 64, 1>}, {pipeline_mode = #tpu.pipeline_mode<synchronous>, transform_indices = @transform_1, window_bounds = array<i64: 16, 128>}, {pipeline_mode = #tpu.pipeline_mode<synchronous>, transform_indices = @transform_2, window_bounds = array<i64: 32, 128>}, {pipeline_mode = #tpu.pipeline_mode<synchronous>, transform_indices = @transform_3, window_bounds = array<i64: 1, 128>}, {transform_indices = @transform_4, window_bounds = array<i64: 8, 32>}, {transform_indices = @transform_5, window_bounds = array<i64: 8, 32>}]} {
    %c0 = arith.constant 0 : index
    %c0_0 = arith.constant 0 : index
    %0 = vector.load %arg1[%c0, %c0_0] : memref<64x1xi32, #tpu.memory_space<vmem>>, vector<64x1xi32>
    %1 = tpu.iota {dimensions = array<i32: 1>} : vector<64x16xi32>
    %2 = vector.broadcast %0 : vector<64x1xi32> to vector<64x16xi32>
    %3 = arith.cmpi eq, %1, %2 : vector<64x16xi32>
    %4 = arith.extui %3 : vector<64x16xi1> to vector<64x16xi32>
    %5 = arith.sitofp %4 : vector<64x16xi32> to vector<64x16xf32>
    %c0_1 = arith.constant 0 : index
    %c0_2 = arith.constant 0 : index
    %6 = vector.load %arg2[%c0_1, %c0_2] : memref<16x128xf32, #tpu.memory_space<vmem>>, vector<16x128xf32>
    %cst = arith.constant dense<0.000000e+00> : vector<64x128xf32>
    %7 = tpu.matmul %5, %6, %cst {dimension_numbers = #tpu.dot_dimension_numbers<[1], [0], [0], [1], [0, 0, 1, 1], [], []>} : vector<64x16xf32>, vector<16x128xf32>, vector<64x128xf32> -> vector<64x128xf32>
    %c0_3 = arith.constant 0 : index
    %c0_4 = arith.constant 0 : index
    %8 = vector.load %arg4[%c0_3, %c0_4] : memref<1x128xf32, #tpu.memory_space<vmem>>, vector<1x128xf32>
    %9 = vector.broadcast %8 : vector<1x128xf32> to vector<64x128xf32>
    %10 = arith.addf %7, %9 : vector<64x128xf32>
    %c0_5 = arith.constant 0 : index
    %c0_6 = arith.constant 0 : index
    %11 = vector.load %arg7[%c0_5, %c0_6] : memref<64x128xf32, #tpu.memory_space<vmem>>, vector<64x128xf32>
    tpu.vector_store %arg7[%c0_5, %c0_6], %10 {strides = array<i32>} : memref<64x128xf32, #tpu.memory_space<vmem>>, vector<64x128xf32>,
    %c0_7 = arith.constant 0 : index
    %c0_8 = arith.constant 0 : index
    %12 = vector.load %arg3[%c0_7, %c0_8] : memref<32x128xbf16, #tpu.memory_space<vmem>>, vector<32x128xbf16>
    %cst_9 = arith.constant 0.000000e+00 : f32
    %13 = vector.broadcast %cst_9 : f32 to vector<8x32xf32>
    %cst_10 = arith.constant 0.000000e+00 : f32
    %14 = vector.broadcast %cst_10 : f32 to vector<8x32xf32>
    %c0_i32 = arith.constant 0 : i32
    %c8_i32 = arith.constant 8 : i32
    %15 = arith.muli %c0_i32, %c8_i32 : i32
    %16 = tpu.assume_multiple %15, 8 : i32
    %17 = arith.index_cast %16 : i32 to index
    %c0_11 = arith.constant 0 : index
    %18 = vector.load %arg7[%17, %c0_11] : memref<64x128xf32, #tpu.memory_space<vmem>>, vector<8x128xf32>
    %19 = arith.truncf %13 : vector<8x32xf32> to vector<8x32xbf16>
    %cst_12 = arith.constant dense<0.000000e+00> : vector<8x128xf32>
    %20 = tpu.matmul %19, %12, %cst_12 {dimension_numbers = #tpu.dot_dimension_numbers<[1], [0], [0], [1], [0, 0, 1, 1], [], []>} : vector<8x32xbf16>, vector<32x128xbf16>, vector<8x128xf32> -> vector<8x128xf32>
    %21 = arith.addf %18, %20 : vector<8x128xf32>
    %22 = vector.extract_strided_slice %21 {offsets = [0, 0], sizes = [8, 32], strides = [1, 1]} : vector<8x128xf32> to vector<8x32xf32>
    %23 = vector.extract_strided_slice %21 {offsets = [0, 32], sizes = [8, 32], strides = [1, 1]} : vector<8x128xf32> to vector<8x32xf32>
    %24 = vector.extract_strided_slice %21 {offsets = [0, 64], sizes = [8, 32], strides = [1, 1]} : vector<8x128xf32> to vector<8x32xf32>
    %25 = vector.extract_strided_slice %21 {offsets = [0, 96], sizes = [8, 32], strides = [1, 1]} : vector<8x128xf32> to vector<8x32xf32>
    %26 = arith.negf %23 : vector<8x32xf32>
    %27 = math.exp %26 : vector<8x32xf32>
    %cst_13 = arith.constant 1.000000e+00 : f32
    %28 = vector.broadcast %cst_13 : f32 to vector<8x32xf32>
    %29 = arith.addf %28, %27 : vector<8x32xf32>
    %30 = arith.divf %28, %29 : vector<8x32xf32>
    %31 = arith.mulf %30, %14 : vector<8x32xf32>
    %32 = arith.negf %22 : vector<8x32xf32>
    %33 = math.exp %32 : vector<8x32xf32>
    %cst_14 = arith.constant 1.000000e+00 : f32
    %34 = vector.broadcast %cst_14 : f32 to vector<8x32xf32>
    %35 = arith.addf %34, %33 : vector<8x32xf32>
    %36 = arith.divf %34, %35 : vector<8x32xf32>
    %37 = math.tanh %24 : vector<8x32xf32>
    %38 = arith.mulf %36, %37 : vector<8x32xf32>
    %39 = arith.addf %31, %38 : vector<8x32xf32>
    %40 = arith.negf %25 : vector<8x32xf32>
    %41 = math.exp %40 : vector<8x32xf32>
    %cst_15 = arith.constant 1.000000e+00 : f32
    %42 = vector.broadcast %cst_15 : f32 to vector<8x32xf32>
    %43 = arith.addf %42, %41 : vector<8x32xf32>
    %44 = arith.divf %42, %43 : vector<8x32xf32>
    %45 = math.tanh %39 : vector<8x32xf32>
    %46 = arith.mulf %44, %45 : vector<8x32xf32>
    %c1_i32 = arith.constant 1 : i32
    %c8_i32_16 = arith.constant 8 : i32
    %47 = arith.muli %c1_i32, %c8_i32_16 : i32
    %48 = tpu.assume_multiple %47, 8 : i32
    %49 = arith.index_cast %48 : i32 to index
    %c0_17 = arith.constant 0 : index
    %50 = vector.load %arg7[%49, %c0_17] : memref<64x128xf32, #tpu.memory_space<vmem>>, vector<8x128xf32>
    %51 = arith.truncf %46 : vector<8x32xf32> to vector<8x32xbf16>
    %cst_18 = arith.constant dense<0.000000e+00> : vector<8x128xf32>
    %52 = tpu.matmul %51, %12, %cst_18 {dimension_numbers = #tpu.dot_dimension_numbers<[1], [0], [0], [1], [0, 0, 1, 1], [], []>} : vector<8x32xbf16>, vector<32x128xbf16>, vector<8x128xf32> -> vector<8x128xf32>
    %53 = arith.addf %50, %52 : vector<8x128xf32>
    %54 = vector.extract_strided_slice %53 {offsets = [0, 0], sizes = [8, 32], strides = [1, 1]} : vector<8x128xf32> to vector<8x32xf32>
    %55 = vector.extract_strided_slice %53 {offsets = [0, 32], sizes = [8, 32], strides = [1, 1]} : vector<8x128xf32> to vector<8x32xf32>
    %56 = vector.extract_strided_slice %53 {offsets = [0, 64], sizes = [8, 32], strides = [1, 1]} : vector<8x128xf32> to vector<8x32xf32>
    %57 = vector.extract_strided_slice %53 {offsets = [0, 96], sizes = [8, 32], strides = [1, 1]} : vector<8x128xf32> to vector<8x32xf32>
    %58 = arith.negf %55 : vector<8x32xf32>
    %59 = math.exp %58 : vector<8x32xf32>
    %cst_19 = arith.constant 1.000000e+00 : f32
    %60 = vector.broadcast %cst_19 : f32 to vector<8x32xf32>
    %61 = arith.addf %60, %59 : vector<8x32xf32>
    %62 = arith.divf %60, %61 : vector<8x32xf32>
    %63 = arith.mulf %62, %39 : vector<8x32xf32>
    %64 = arith.negf %54 : vector<8x32xf32>
    %65 = math.exp %64 : vector<8x32xf32>
    %cst_20 = arith.constant 1.000000e+00 : f32
    %66 = vector.broadcast %cst_20 : f32 to vector<8x32xf32>
    %67 = arith.addf %66, %65 : vector<8x32xf32>
    %68 = arith.divf %66, %67 : vector<8x32xf32>
    %69 = math.tanh %56 : vector<8x32xf32>
    %70 = arith.mulf %68, %69 : vector<8x32xf32>
    %71 = arith.addf %63, %70 : vector<8x32xf32>
    %72 = arith.negf %57 : vector<8x32xf32>
    %73 = math.exp %72 : vector<8x32xf32>
    %cst_21 = arith.constant 1.000000e+00 : f32
    %74 = vector.broadcast %cst_21 : f32 to vector<8x32xf32>
    %75 = arith.addf %74, %73 : vector<8x32xf32>
    %76 = arith.divf %74, %75 : vector<8x32xf32>
    %77 = math.tanh %71 : vector<8x32xf32>
    %78 = arith.mulf %76, %77 : vector<8x32xf32>
    %c2_i32 = arith.constant 2 : i32
    %c8_i32_22 = arith.constant 8 : i32
    %79 = arith.muli %c2_i32, %c8_i32_22 : i32
    %80 = tpu.assume_multiple %79, 8 : i32
    %81 = arith.index_cast %80 : i32 to index
    %c0_23 = arith.constant 0 : index
    %82 = vector.load %arg7[%81, %c0_23] : memref<64x128xf32, #tpu.memory_space<vmem>>, vector<8x128xf32>
    %83 = arith.truncf %78 : vector<8x32xf32> to vector<8x32xbf16>
    %cst_24 = arith.constant dense<0.000000e+00> : vector<8x128xf32>
    %84 = tpu.matmul %83, %12, %cst_24 {dimension_numbers = #tpu.dot_dimension_numbers<[1], [0], [0], [1], [0, 0, 1, 1], [], []>} : vector<8x32xbf16>, vector<32x128xbf16>, vector<8x128xf32> -> vector<8x128xf32>
    %85 = arith.addf %82, %84 : vector<8x128xf32>
    %86 = vector.extract_strided_slice %85 {offsets = [0, 0], sizes = [8, 32], strides = [1, 1]} : vector<8x128xf32> to vector<8x32xf32>
    %87 = vector.extract_strided_slice %85 {offsets = [0, 32], sizes = [8, 32], strides = [1, 1]} : vector<8x128xf32> to vector<8x32xf32>
    %88 = vector.extract_strided_slice %85 {offsets = [0, 64], sizes = [8, 32], strides = [1, 1]} : vector<8x128xf32> to vector<8x32xf32>
    %89 = vector.extract_strided_slice %85 {offsets = [0, 96], sizes = [8, 32], strides = [1, 1]} : vector<8x128xf32> to vector<8x32xf32>
    %90 = arith.negf %87 : vector<8x32xf32>
    %91 = math.exp %90 : vector<8x32xf32>
    %cst_25 = arith.constant 1.000000e+00 : f32
    %92 = vector.broadcast %cst_25 : f32 to vector<8x32xf32>
    %93 = arith.addf %92, %91 : vector<8x32xf32>
    %94 = arith.divf %92, %93 : vector<8x32xf32>
    %95 = arith.mulf %94, %71 : vector<8x32xf32>
    %96 = arith.negf %86 : vector<8x32xf32>
    %97 = math.exp %96 : vector<8x32xf32>
    %cst_26 = arith.constant 1.000000e+00 : f32
    %98 = vector.broadcast %cst_26 : f32 to vector<8x32xf32>
    %99 = arith.addf %98, %97 : vector<8x32xf32>
    %100 = arith.divf %98, %99 : vector<8x32xf32>
    %101 = math.tanh %88 : vector<8x32xf32>
    %102 = arith.mulf %100, %101 : vector<8x32xf32>
    %103 = arith.addf %95, %102 : vector<8x32xf32>
    %104 = arith.negf %89 : vector<8x32xf32>
    %105 = math.exp %104 : vector<8x32xf32>
    %cst_27 = arith.constant 1.000000e+00 : f32
    %106 = vector.broadcast %cst_27 : f32 to vector<8x32xf32>
    %107 = arith.addf %106, %105 : vector<8x32xf32>
    %108 = arith.divf %106, %107 : vector<8x32xf32>
    %109 = math.tanh %103 : vector<8x32xf32>
    %110 = arith.mulf %108, %109 : vector<8x32xf32>
    %c3_i32 = arith.constant 3 : i32
    %c8_i32_28 = arith.constant 8 : i32
    %111 = arith.muli %c3_i32, %c8_i32_28 : i32
    %112 = tpu.assume_multiple %111, 8 : i32
    %113 = arith.index_cast %112 : i32 to index
    %c0_29 = arith.constant 0 : index
    %114 = vector.load %arg7[%113, %c0_29] : memref<64x128xf32, #tpu.memory_space<vmem>>, vector<8x128xf32>
    %115 = arith.truncf %110 : vector<8x32xf32> to vector<8x32xbf16>
    %cst_30 = arith.constant dense<0.000000e+00> : vector<8x128xf32>
    %116 = tpu.matmul %115, %12, %cst_30 {dimension_numbers = #tpu.dot_dimension_numbers<[1], [0], [0], [1], [0, 0, 1, 1], [], []>} : vector<8x32xbf16>, vector<32x128xbf16>, vector<8x128xf32> -> vector<8x128xf32>
    %117 = arith.addf %114, %116 : vector<8x128xf32>
    %118 = vector.extract_strided_slice %117 {offsets = [0, 0], sizes = [8, 32], strides = [1, 1]} : vector<8x128xf32> to vector<8x32xf32>
    %119 = vector.extract_strided_slice %117 {offsets = [0, 32], sizes = [8, 32], strides = [1, 1]} : vector<8x128xf32> to vector<8x32xf32>
    %120 = vector.extract_strided_slice %117 {offsets = [0, 64], sizes = [8, 32], strides = [1, 1]} : vector<8x128xf32> to vector<8x32xf32>
    %121 = vector.extract_strided_slice %117 {offsets = [0, 96], sizes = [8, 32], strides = [1, 1]} : vector<8x128xf32> to vector<8x32xf32>
    %122 = arith.negf %119 : vector<8x32xf32>
    %123 = math.exp %122 : vector<8x32xf32>
    %cst_31 = arith.constant 1.000000e+00 : f32
    %124 = vector.broadcast %cst_31 : f32 to vector<8x32xf32>
    %125 = arith.addf %124, %123 : vector<8x32xf32>
    %126 = arith.divf %124, %125 : vector<8x32xf32>
    %127 = arith.mulf %126, %103 : vector<8x32xf32>
    %128 = arith.negf %118 : vector<8x32xf32>
    %129 = math.exp %128 : vector<8x32xf32>
    %cst_32 = arith.constant 1.000000e+00 : f32
    %130 = vector.broadcast %cst_32 : f32 to vector<8x32xf32>
    %131 = arith.addf %130, %129 : vector<8x32xf32>
    %132 = arith.divf %130, %131 : vector<8x32xf32>
    %133 = math.tanh %120 : vector<8x32xf32>
    %134 = arith.mulf %132, %133 : vector<8x32xf32>
    %135 = arith.addf %127, %134 : vector<8x32xf32>
    %136 = arith.negf %121 : vector<8x32xf32>
    %137 = math.exp %136 : vector<8x32xf32>
    %cst_33 = arith.constant 1.000000e+00 : f32
    %138 = vector.broadcast %cst_33 : f32 to vector<8x32xf32>
    %139 = arith.addf %138, %137 : vector<8x32xf32>
    %140 = arith.divf %138, %139 : vector<8x32xf32>
    %141 = math.tanh %135 : vector<8x32xf32>
    %142 = arith.mulf %140, %141 : vector<8x32xf32>
    %c4_i32 = arith.constant 4 : i32
    %c8_i32_34 = arith.constant 8 : i32
    %143 = arith.muli %c4_i32, %c8_i32_34 : i32
    %144 = tpu.assume_multiple %143, 8 : i32
    %145 = arith.index_cast %144 : i32 to index
    %c0_35 = arith.constant 0 : index
    %146 = vector.load %arg7[%145, %c0_35] : memref<64x128xf32, #tpu.memory_space<vmem>>, vector<8x128xf32>
    %147 = arith.truncf %142 : vector<8x32xf32> to vector<8x32xbf16>
    %cst_36 = arith.constant dense<0.000000e+00> : vector<8x128xf32>
    %148 = tpu.matmul %147, %12, %cst_36 {dimension_numbers = #tpu.dot_dimension_numbers<[1], [0], [0], [1], [0, 0, 1, 1], [], []>} : vector<8x32xbf16>, vector<32x128xbf16>, vector<8x128xf32> -> vector<8x128xf32>
    %149 = arith.addf %146, %148 : vector<8x128xf32>
    %150 = vector.extract_strided_slice %149 {offsets = [0, 0], sizes = [8, 32], strides = [1, 1]} : vector<8x128xf32> to vector<8x32xf32>
    %151 = vector.extract_strided_slice %149 {offsets = [0, 32], sizes = [8, 32], strides = [1, 1]} : vector<8x128xf32> to vector<8x32xf32>
    %152 = vector.extract_strided_slice %149 {offsets = [0, 64], sizes = [8, 32], strides = [1, 1]} : vector<8x128xf32> to vector<8x32xf32>
    %153 = vector.extract_strided_slice %149 {offsets = [0, 96], sizes = [8, 32], strides = [1, 1]} : vector<8x128xf32> to vector<8x32xf32>
    %154 = arith.negf %151 : vector<8x32xf32>
    %155 = math.exp %154 : vector<8x32xf32>
    %cst_37 = arith.constant 1.000000e+00 : f32
    %156 = vector.broadcast %cst_37 : f32 to vector<8x32xf32>
    %157 = arith.addf %156, %155 : vector<8x32xf32>
    %158 = arith.divf %156, %157 : vector<8x32xf32>
    %159 = arith.mulf %158, %135 : vector<8x32xf32>
    %160 = arith.negf %150 : vector<8x32xf32>
    %161 = math.exp %160 : vector<8x32xf32>
    %cst_38 = arith.constant 1.000000e+00 : f32
    %162 = vector.broadcast %cst_38 : f32 to vector<8x32xf32>
    %163 = arith.addf %162, %161 : vector<8x32xf32>
    %164 = arith.divf %162, %163 : vector<8x32xf32>
    %165 = math.tanh %152 : vector<8x32xf32>
    %166 = arith.mulf %164, %165 : vector<8x32xf32>
    %167 = arith.addf %159, %166 : vector<8x32xf32>
    %168 = arith.negf %153 : vector<8x32xf32>
    %169 = math.exp %168 : vector<8x32xf32>
    %cst_39 = arith.constant 1.000000e+00 : f32
    %170 = vector.broadcast %cst_39 : f32 to vector<8x32xf32>
    %171 = arith.addf %170, %169 : vector<8x32xf32>
    %172 = arith.divf %170, %171 : vector<8x32xf32>
    %173 = math.tanh %167 : vector<8x32xf32>
    %174 = arith.mulf %172, %173 : vector<8x32xf32>
    %c5_i32 = arith.constant 5 : i32
    %c8_i32_40 = arith.constant 8 : i32
    %175 = arith.muli %c5_i32, %c8_i32_40 : i32
    %176 = tpu.assume_multiple %175, 8 : i32
    %177 = arith.index_cast %176 : i32 to index
    %c0_41 = arith.constant 0 : index
    %178 = vector.load %arg7[%177, %c0_41] : memref<64x128xf32, #tpu.memory_space<vmem>>, vector<8x128xf32>
    %179 = arith.truncf %174 : vector<8x32xf32> to vector<8x32xbf16>
    %cst_42 = arith.constant dense<0.000000e+00> : vector<8x128xf32>
    %180 = tpu.matmul %179, %12, %cst_42 {dimension_numbers = #tpu.dot_dimension_numbers<[1], [0], [0], [1], [0, 0, 1, 1], [], []>} : vector<8x32xbf16>, vector<32x128xbf16>, vector<8x128xf32> -> vector<8x128xf32>
    %181 = arith.addf %178, %180 : vector<8x128xf32>
    %182 = vector.extract_strided_slice %181 {offsets = [0, 0], sizes = [8, 32], strides = [1, 1]} : vector<8x128xf32> to vector<8x32xf32>
    %183 = vector.extract_strided_slice %181 {offsets = [0, 32], sizes = [8, 32], strides = [1, 1]} : vector<8x128xf32> to vector<8x32xf32>
    %184 = vector.extract_strided_slice %181 {offsets = [0, 64], sizes = [8, 32], strides = [1, 1]} : vector<8x128xf32> to vector<8x32xf32>
    %185 = vector.extract_strided_slice %181 {offsets = [0, 96], sizes = [8, 32], strides = [1, 1]} : vector<8x128xf32> to vector<8x32xf32>
    %186 = arith.negf %183 : vector<8x32xf32>
    %187 = math.exp %186 : vector<8x32xf32>
    %cst_43 = arith.constant 1.000000e+00 : f32
    %188 = vector.broadcast %cst_43 : f32 to vector<8x32xf32>
    %189 = arith.addf %188, %187 : vector<8x32xf32>
    %190 = arith.divf %188, %189 : vector<8x32xf32>
    %191 = arith.mulf %190, %167 : vector<8x32xf32>
    %192 = arith.negf %182 : vector<8x32xf32>
    %193 = math.exp %192 : vector<8x32xf32>
    %cst_44 = arith.constant 1.000000e+00 : f32
    %194 = vector.broadcast %cst_44 : f32 to vector<8x32xf32>
    %195 = arith.addf %194, %193 : vector<8x32xf32>
    %196 = arith.divf %194, %195 : vector<8x32xf32>
    %197 = math.tanh %184 : vector<8x32xf32>
    %198 = arith.mulf %196, %197 : vector<8x32xf32>
    %199 = arith.addf %191, %198 : vector<8x32xf32>
    %200 = arith.negf %185 : vector<8x32xf32>
    %201 = math.exp %200 : vector<8x32xf32>
    %cst_45 = arith.constant 1.000000e+00 : f32
    %202 = vector.broadcast %cst_45 : f32 to vector<8x32xf32>
    %203 = arith.addf %202, %201 : vector<8x32xf32>
    %204 = arith.divf %202, %203 : vector<8x32xf32>
    %205 = math.tanh %199 : vector<8x32xf32>
    %206 = arith.mulf %204, %205 : vector<8x32xf32>
    %c6_i32 = arith.constant 6 : i32
    %c8_i32_46 = arith.constant 8 : i32
    %207 = arith.muli %c6_i32, %c8_i32_46 : i32
    %208 = tpu.assume_multiple %207, 8 : i32
    %209 = arith.index_cast %208 : i32 to index
    %c0_47 = arith.constant 0 : index
    %210 = vector.load %arg7[%209, %c0_47] : memref<64x128xf32, #tpu.memory_space<vmem>>, vector<8x128xf32>
    %211 = arith.truncf %206 : vector<8x32xf32> to vector<8x32xbf16>
    %cst_48 = arith.constant dense<0.000000e+00> : vector<8x128xf32>
    %212 = tpu.matmul %211, %12, %cst_48 {dimension_numbers = #tpu.dot_dimension_numbers<[1], [0], [0], [1], [0, 0, 1, 1], [], []>} : vector<8x32xbf16>, vector<32x128xbf16>, vector<8x128xf32> -> vector<8x128xf32>
    %213 = arith.addf %210, %212 : vector<8x128xf32>
    %214 = vector.extract_strided_slice %213 {offsets = [0, 0], sizes = [8, 32], strides = [1, 1]} : vector<8x128xf32> to vector<8x32xf32>
    %215 = vector.extract_strided_slice %213 {offsets = [0, 32], sizes = [8, 32], strides = [1, 1]} : vector<8x128xf32> to vector<8x32xf32>
    %216 = vector.extract_strided_slice %213 {offsets = [0, 64], sizes = [8, 32], strides = [1, 1]} : vector<8x128xf32> to vector<8x32xf32>
    %217 = vector.extract_strided_slice %213 {offsets = [0, 96], sizes = [8, 32], strides = [1, 1]} : vector<8x128xf32> to vector<8x32xf32>
    %218 = arith.negf %215 : vector<8x32xf32>
    %219 = math.exp %218 : vector<8x32xf32>
    %cst_49 = arith.constant 1.000000e+00 : f32
    %220 = vector.broadcast %cst_49 : f32 to vector<8x32xf32>
    %221 = arith.addf %220, %219 : vector<8x32xf32>
    %222 = arith.divf %220, %221 : vector<8x32xf32>
    %223 = arith.mulf %222, %199 : vector<8x32xf32>
    %224 = arith.negf %214 : vector<8x32xf32>
    %225 = math.exp %224 : vector<8x32xf32>
    %cst_50 = arith.constant 1.000000e+00 : f32
    %226 = vector.broadcast %cst_50 : f32 to vector<8x32xf32>
    %227 = arith.addf %226, %225 : vector<8x32xf32>
    %228 = arith.divf %226, %227 : vector<8x32xf32>
    %229 = math.tanh %216 : vector<8x32xf32>
    %230 = arith.mulf %228, %229 : vector<8x32xf32>
    %231 = arith.addf %223, %230 : vector<8x32xf32>
    %232 = arith.negf %217 : vector<8x32xf32>
    %233 = math.exp %232 : vector<8x32xf32>
    %cst_51 = arith.constant 1.000000e+00 : f32
    %234 = vector.broadcast %cst_51 : f32 to vector<8x32xf32>
    %235 = arith.addf %234, %233 : vector<8x32xf32>
    %236 = arith.divf %234, %235 : vector<8x32xf32>
    %237 = math.tanh %231 : vector<8x32xf32>
    %238 = arith.mulf %236, %237 : vector<8x32xf32>
    %c7_i32 = arith.constant 7 : i32
    %c8_i32_52 = arith.constant 8 : i32
    %239 = arith.muli %c7_i32, %c8_i32_52 : i32
    %240 = tpu.assume_multiple %239, 8 : i32
    %241 = arith.index_cast %240 : i32 to index
    %c0_53 = arith.constant 0 : index
    %242 = vector.load %arg7[%241, %c0_53] : memref<64x128xf32, #tpu.memory_space<vmem>>, vector<8x128xf32>
    %243 = arith.truncf %238 : vector<8x32xf32> to vector<8x32xbf16>
    %cst_54 = arith.constant dense<0.000000e+00> : vector<8x128xf32>
    %244 = tpu.matmul %243, %12, %cst_54 {dimension_numbers = #tpu.dot_dimension_numbers<[1], [0], [0], [1], [0, 0, 1, 1], [], []>} : vector<8x32xbf16>, vector<32x128xbf16>, vector<8x128xf32> -> vector<8x128xf32>
    %245 = arith.addf %242, %244 : vector<8x128xf32>
    %246 = vector.extract_strided_slice %245 {offsets = [0, 0], sizes = [8, 32], strides = [1, 1]} : vector<8x128xf32> to vector<8x32xf32>
    %247 = vector.extract_strided_slice %245 {offsets = [0, 32], sizes = [8, 32], strides = [1, 1]} : vector<8x128xf32> to vector<8x32xf32>
    %248 = vector.extract_strided_slice %245 {offsets = [0, 64], sizes = [8, 32], strides = [1, 1]} : vector<8x128xf32> to vector<8x32xf32>
    %249 = vector.extract_strided_slice %245 {offsets = [0, 96], sizes = [8, 32], strides = [1, 1]} : vector<8x128xf32> to vector<8x32xf32>
    %250 = arith.negf %247 : vector<8x32xf32>
    %251 = math.exp %250 : vector<8x32xf32>
    %cst_55 = arith.constant 1.000000e+00 : f32
    %252 = vector.broadcast %cst_55 : f32 to vector<8x32xf32>
    %253 = arith.addf %252, %251 : vector<8x32xf32>
    %254 = arith.divf %252, %253 : vector<8x32xf32>
    %255 = arith.mulf %254, %231 : vector<8x32xf32>
    %256 = arith.negf %246 : vector<8x32xf32>
    %257 = math.exp %256 : vector<8x32xf32>
    %cst_56 = arith.constant 1.000000e+00 : f32
    %258 = vector.broadcast %cst_56 : f32 to vector<8x32xf32>
    %259 = arith.addf %258, %257 : vector<8x32xf32>
    %260 = arith.divf %258, %259 : vector<8x32xf32>
    %261 = math.tanh %248 : vector<8x32xf32>
    %262 = arith.mulf %260, %261 : vector<8x32xf32>
    %263 = arith.addf %255, %262 : vector<8x32xf32>
    %264 = arith.negf %249 : vector<8x32xf32>
    %265 = math.exp %264 : vector<8x32xf32>
    %cst_57 = arith.constant 1.000000e+00 : f32
    %266 = vector.broadcast %cst_57 : f32 to vector<8x32xf32>
    %267 = arith.addf %266, %265 : vector<8x32xf32>
    %268 = arith.divf %266, %267 : vector<8x32xf32>
    %269 = math.tanh %263 : vector<8x32xf32>
    %270 = arith.mulf %268, %269 : vector<8x32xf32>
    %c8_i32_58 = arith.constant 8 : i32
    %c0_59 = arith.constant 0 : index
    %c0_60 = arith.constant 0 : index
    %271 = vector.load %arg5[%c0_59, %c0_60] : memref<8x32xf32, #tpu.memory_space<vmem>>, vector<8x32xf32>
    tpu.vector_store %arg5[%c0_59, %c0_60], %270 {strides = array<i32>} : memref<8x32xf32, #tpu.memory_space<vmem>>, vector<8x32xf32>,
    %c0_61 = arith.constant 0 : index
    %c0_62 = arith.constant 0 : index
    %272 = vector.load %arg6[%c0_61, %c0_62] : memref<8x32xf32, #tpu.memory_space<vmem>>, vector<8x32xf32>
    tpu.vector_store %arg6[%c0_61, %c0_62], %263 {strides = array<i32>} : memref<8x32xf32, #tpu.memory_space<vmem>>, vector<8x32xf32>,
    return
  }
  func.func @transform_0(%arg0: i32) -> (i32, i32) {
    %c0_i32 = arith.constant 0 : i32
    %c0_i32_0 = arith.constant 0 : i32
    return %arg0, %c0_i32 : i32, i32
  }
  func.func @transform_1(%arg0: i32) -> (i32, i32) {
    %c0_i32 = arith.constant 0 : i32
    %c0_i32_0 = arith.constant 0 : i32
    %c0_i32_1 = arith.constant 0 : i32
    return %c0_i32, %c0_i32_0 : i32, i32
  }
  func.func @transform_2(%arg0: i32) -> (i32, i32) {
    %c0_i32 = arith.constant 0 : i32
    %c0_i32_0 = arith.constant 0 : i32
    %c0_i32_1 = arith.constant 0 : i32
    return %c0_i32, %c0_i32_0 : i32, i32
  }
  func.func @transform_3(%arg0: i32) -> (i32, i32) {
    %c0_i32 = arith.constant 0 : i32
    %c0_i32_0 = arith.constant 0 : i32
    %c0_i32_1 = arith.constant 0 : i32
    return %c0_i32, %c0_i32_0 : i32, i32
  }
  func.func @transform_4(%arg0: i32) -> (i32, i32) {
    %c0_i32 = arith.constant 0 : i32
    %c0_i32_0 = arith.constant 0 : i32
    return %arg0, %c0_i32 : i32, i32
  }
  func.func @transform_5(%arg0: i32) -> (i32, i32) {
    %c0_i32 = arith.constant 0 : i32
    %c0_i32_0 = arith.constant 0 : i32
    return %arg0, %c0_i32 : i32, i32
  }
}

</mosaic_0001>

<llo_original>
// kernel: encoder_forward.1
$region0: #{encoder_forward.1}
  #allocation0 [shape = 'u32[]', space=smem, size = 0x4, offset = 0x4, fixed_abs, tag = 'smem constant byte address 0x4 - core index']
  #allocation1 [shape = 'u32[144,128]{1,0:T(1,128)}', space=vmem, size = 0x12000, scoped, tag = 'internal scratch']
  #allocation2 [shape = 'f32[64,128]{1,0:T(8,128)}', space=vmem, size = 0x8000, scoped, tag = 'scratch operand']
  %s0 = inlined_call_operand.vmem [shape: s32[128,1], index: 0, kind: input, shape index: {}]
  %s1 = inlined_call_operand.vmem [shape: f32[16,128], index: 1, kind: input, shape index: {}]
  %s2 = inlined_call_operand.vmem [shape: bf16[32,128], index: 2, kind: input, shape index: {}]
  %s3 = inlined_call_operand.vmem [shape: f32[1,128], index: 3, kind: input, shape index: {}]
  %s4 = inlined_call_operand.hbm [shape: f32[16,32], index: 4, kind: output, shape index: {0}]
  %s5 = inlined_call_operand.hbm [shape: f32[16,32], index: 5, kind: output, shape index: {1}]
  %6 = xla_tuple %s4, %s5
  %s7 = sld [smem:[#allocation0]]
  $region57: #{encoder_forward.1} parent=0
    _
  %s9 = ssub.s32 1, %s7
  %s10 = scalar_select 0, %s9, %s7
  $region1: #{encoder_forward.1} parent=0
    #allocation3 [shape = 'u8[8192]{0}', space=vmem, size = 0x2000, scoped, tag = 'output window, operand 0']
    #allocation4 [shape = 's32[2]{0}', space=sflag, size = 0x8, scoped, tag = 'scoped memory for encoder_forward.1']
    #allocation5 [shape = 'u8[8192]{0}', space=vmem, size = 0x2000, scoped, tag = 'output window, operand 1']
    #allocation6 [shape = 's32[2]{0}', space=sflag, size = 0x8, scoped, tag = 'scoped memory for encoder_forward.1']
    %11 = vsyncpa [#allocation4], 0
    %s12 = scalar_lea.sflag [#allocation4], 1
    %13 = vsyncpa %s12, 0
    %14 = vsyncpa [#allocation6], 0
    %s15 = scalar_lea.sflag [#allocation6], 1
    %16 = vsyncpa %s15, 0
    loop: start=0, step=1, limit=4
    $region2: #{encoder_forward.1} parent=1 // loop_pre_header
      _
    $region3: #{encoder_forward.1} parent=1 // loop_header
      %s18 = sphi 0, %s22
      %p19 = scmp.ge.s32.totalorder %s18, 4
      %s28 = sphi 0, %s30
      %s31 = sphi 0, %s28
      %s32 = sphi 0, %s31
      %s48 = sphi 0, %s32
      %s52 = sphi 0, %s52
      %s54 = sphi 0, %s52
      %s55 = sphi 0, %s54
      %s69 = sphi 0, %s55
      %s73 = sphi 0, %s73
      %s75 = sphi 0, %s73
      %s76 = sphi 0, %s75
      %s90 = sphi 0, %s76
      %s94 = sphi 0, %s94
      %s96 = sphi 0, %s94
      %s97 = sphi 0, %s96
      %s111 = sphi 0, %s97
      %s117 = sphi 0, %s119
      %s120 = sphi 0, %s117
      %s121 = sphi 0, %s120
      %s137 = sphi 0, %s121
      %s143 = sphi 0, %s145
      %s146 = sphi 0, %s143
      %s147 = sphi 0, %s146
      %s163 = sphi 0, %s147
    $region4: #{encoder_forward.1} parent=1 // loop_header_branch
      %21 = sbr.rel (%p19) target = $region8
    $region5: #{encoder_forward.1} parent=1 // loop_body
      %s23 = ssub.s32 %s18, 1
      %s24 = ssub.s32 %s18, 2
      %s25 = sadd.s32 %s18, 1
      %s26 = ssub.s32 %s18, %s25
      %p27 = scmp.eq.s32.totalorder %s26, 0
      %s29 = sadd.s32 %s28, 1
      %s30 = scalar_select %p27, %s28, %s29
      %p33 = pneg %p27
      %p34 = scmp.eq.s32.totalorder %s18, 1
      %p35 = por %p33, %p34
      %p36 = scmp.ne.s32.totalorder %s28, %s31
      %p37 = scmp.eq.s32.totalorder %s18, 0
      %p38 = por %p36, %p37
      %p39 = scmp.ne.s32.totalorder %s28, %s31
      %p40 = scmp.eq.s32.totalorder %s23, 1
      %p41 = por %p39, %p40
      %p42 = scmp.ne.s32.totalorder %s31, %s32
      %p43 = scmp.eq.s32.totalorder %s23, 0
      %p44 = por %p42, %p43
      %p45 = scmp.ne.s32.totalorder %s31, %s32
      %p46 = scmp.eq.s32.totalorder %s24, 1
      %p47 = por %p45, %p46
      %p49 = scmp.ne.s32.totalorder %s32, %s48
      %p50 = scmp.eq.s32.totalorder %s24, 0
      %p51 = por %p49, %p50
      %s53 = sadd.s32 %s52, 1
      %p56 = scmp.eq.s32.totalorder %s18, 1
      %p57 = scmp.ne.s32.totalorder %s52, %s54
      %p58 = scmp.eq.s32.totalorder %s18, 0
      %p59 = por %p57, %p58
      %p60 = scmp.ne.s32.totalorder %s52, %s54
      %p61 = scmp.eq.s32.totalorder %s23, 1
      %p62 = por %p60, %p61
      %p63 = scmp.ne.s32.totalorder %s54, %s55
      %p64 = scmp.eq.s32.totalorder %s23, 0
      %p65 = por %p63, %p64
      %p66 = scmp.ne.s32.totalorder %s54, %s55
      %p67 = scmp.eq.s32.totalorder %s24, 1
      %p68 = por %p66, %p67
      %p70 = scmp.ne.s32.totalorder %s55, %s69
      %p71 = scmp.eq.s32.totalorder %s24, 0
      %p72 = por %p70, %p71
      %s74 = sadd.s32 %s73, 1
      %p77 = scmp.eq.s32.totalorder %s18, 1
      %p78 = scmp.ne.s32.totalorder %s73, %s75
      %p79 = scmp.eq.s32.totalorder %s18, 0
      %p80 = por %p78, %p79
      %p81 = scmp.ne.s32.totalorder %s73, %s75
      %p82 = scmp.eq.s32.totalorder %s23, 1
      %p83 = por %p81, %p82
      %p84 = scmp.ne.s32.totalorder %s75, %s76
      %p85 = scmp.eq.s32.totalorder %s23, 0
      %p86 = por %p84, %p85
      %p87 = scmp.ne.s32.totalorder %s75, %s76
      %p88 = scmp.eq.s32.totalorder %s24, 1
      %p89 = por %p87, %p88
      %p91 = scmp.ne.s32.totalorder %s76, %s90
      %p92 = scmp.eq.s32.totalorder %s24, 0
      %p93 = por %p91, %p92
      %s95 = sadd.s32 %s94, 1
      %p98 = scmp.eq.s32.totalorder %s18, 1
      %p99 = scmp.ne.s32.totalorder %s94, %s96
      %p100 = scmp.eq.s32.totalorder %s18, 0
      %p101 = por %p99, %p100
      %p102 = scmp.ne.s32.totalorder %s94, %s96
      %p103 = scmp.eq.s32.totalorder %s23, 1
      %p104 = por %p102, %p103
      %p105 = scmp.ne.s32.totalorder %s96, %s97
      %p106 = scmp.eq.s32.totalorder %s23, 0
      %p107 = por %p105, %p106
      %p108 = scmp.ne.s32.totalorder %s96, %s97
      %p109 = scmp.eq.s32.totalorder %s24, 1
      %p110 = por %p108, %p109
      %p112 = scmp.ne.s32.totalorder %s97, %s111
      %p113 = scmp.eq.s32.totalorder %s24, 0
      %p114 = por %p112, %p113
      %s115 = ssub.s32 %s18, %s25
      %p116 = scmp.eq.s32.totalorder %s115, 0
      %s118 = sadd.s32 %s117, 1
      %s119 = scalar_select %p116, %s117, %s118
      %p122 = pneg %p116
      %p123 = scmp.eq.s32.totalorder %s18, 1
      %p124 = por %p122, %p123
      %p125 = scmp.ne.s32.totalorder %s117, %s120
      %p126 = scmp.eq.s32.totalorder %s18, 0
      %p127 = por %p125, %p126
      %p128 = scmp.ne.s32.totalorder %s117, %s120
      %p129 = scmp.eq.s32.totalorder %s23, 1
      %p130 = por %p128, %p129
      %p131 = scmp.ne.s32.totalorder %s120, %s121
      %p132 = scmp.eq.s32.totalorder %s23, 0
      %p133 = por %p131, %p132
      %p134 = scmp.ne.s32.totalorder %s120, %s121
      %p135 = scmp.eq.s32.totalorder %s24, 1
      %p136 = por %p134, %p135
      %p138 = scmp.ne.s32.totalorder %s121, %s137
      %p139 = scmp.eq.s32.totalorder %s24, 0
      %p140 = por %p138, %p139
      %s141 = ssub.s32 %s18, %s25
      %p142 = scmp.eq.s32.totalorder %s141, 0
      %s144 = sadd.s32 %s143, 1
      %s145 = scalar_select %p142, %s143, %s144
      %p148 = pneg %p142
      %p149 = scmp.eq.s32.totalorder %s18, 1
      %p150 = por %p148, %p149
      %p151 = scmp.ne.s32.totalorder %s143, %s146
      %p152 = scmp.eq.s32.totalorder %s18, 0
      %p153 = por %p151, %p152
      %p154 = scmp.ne.s32.totalorder %s143, %s146
      %p155 = scmp.eq.s32.totalorder %s23, 1
      %p156 = por %p154, %p155
      %p157 = scmp.ne.s32.totalorder %s146, %s147
      %p158 = scmp.eq.s32.totalorder %s23, 0
      %p159 = por %p157, %p158
      %p160 = scmp.ne.s32.totalorder %s146, %s147
      %p161 = scmp.eq.s32.totalorder %s24, 1
      %p162 = por %p160, %p161
      %p164 = scmp.ne.s32.totalorder %s147, %s163
      %p165 = scmp.eq.s32.totalorder %s24, 0
      %p166 = por %p164, %p165
      %p167 = scmp.le.s32.totalorder 1, %s18
      %p168 = scmp.lt.s32.totalorder %s18, 3
      %p169 = pnand %p167, %p168
      %p170 = pneg %p169
      // Predicated region
      $region9: #{encoder_forward.1} parent=5 // pred_check
        _
      $region10: #{encoder_forward.1} parent=5 // pred_check_branch
        %172 = sbr.rel (%p169) target = $region12
      $region11: #{encoder_forward.1} parent=5 // pred_region
        %s173 = ssub.s32 %s18, 1
        // Predicated region
        $region13: #{encoder_forward.1} parent=11 // pred_check
          %p174 = pneg %p65
        $region14: #{encoder_forward.1} parent=11 // pred_check_branch
          %176 = sbr.rel (%p174) target = $region16
        $region15: #{encoder_forward.1} parent=11 // pred_region
          _
        $region16: #{encoder_forward.1} parent=11 // pred_fallthru
          _
        // Predicated region
        $region17: #{encoder_forward.1} parent=11 // pred_check
          %p177 = pneg %p86
        $region18: #{encoder_forward.1} parent=11 // pred_check_branch
          %179 = sbr.rel (%p177) target = $region20
        $region19: #{encoder_forward.1} parent=11 // pred_region
          _
        $region20: #{encoder_forward.1} parent=11 // pred_fallthru
          _
        // Predicated region
        $region21: #{encoder_forward.1} parent=11 // pred_check
          %p180 = pneg %p107
        $region22: #{encoder_forward.1} parent=11 // pred_check_branch
          %182 = sbr.rel (%p180) target = $region24
        $region23: #{encoder_forward.1} parent=11 // pred_region
          _
        $region24: #{encoder_forward.1} parent=11 // pred_fallthru
          _
      $region12: #{encoder_forward.1} parent=5 // pred_fallthru
        _
      %p183 = scmp.lt.s32.totalorder %s18, 2
      // Predicated region
      $region25: #{encoder_forward.1} parent=5 // pred_check
        %p184 = pneg %p183
      $region26: #{encoder_forward.1} parent=5 // pred_check_branch
        %186 = sbr.rel (%p184) target = $region28
      $region27: #{encoder_forward.1} parent=5 // pred_region
        // Predicated region
        $region29: #{encoder_forward.1} parent=27 // pred_check
          %p187 = pneg %p38
        $region30: #{encoder_forward.1} parent=27 // pred_check_branch
          %189 = sbr.rel (%p187) target = $region32
        $region31: #{encoder_forward.1} parent=27 // pred_region
          %s190 = smul.u32 8, %s18
          %p191 = scmp.lt.s32.totalorder %s190, 15
          %s192 = scalar_select %p191, %s190, 15
          %s193 = smul.addr %s192, 8
          %s194 = scalar_lea.vmem %s0, %s193
          %s195 = smul.u32 8, %s18
        $region32: #{encoder_forward.1} parent=27 // pred_fallthru
          _
      $region28: #{encoder_forward.1} parent=5 // pred_fallthru
        _
      %p196 = scmp.le.s32.totalorder 1, %s18
      %p197 = scmp.lt.s32.totalorder %s18, 3
      %p198 = pnand %p196, %p197
      %p199 = pneg %p198
      // Predicated region
      $region33: #{encoder_forward.1} parent=5 // pred_check
        _
      $region34: #{encoder_forward.1} parent=5 // pred_check_branch
        %201 = sbr.rel (%p198) target = $region36
      $region35: #{encoder_forward.1} parent=5 // pred_region
        %s202 = ssub.s32 %s18, 1
        %s203 = smul.u32 8, %s23
        %p204 = scmp.lt.s32.totalorder %s203, 15
        %s205 = scalar_select %p204, %s203, 15
        %s206 = smul.addr %s205, 8
        %s207 = scalar_lea.vmem %s0, %s206
        %p208 = pneg %p44
        %p209 = pneg %p41
        %p210 = pneg %p65
        %p211 = pneg %p62
        %p212 = pneg %p86
        %p213 = pneg %p83
        %p214 = pneg %p107
        %p215 = pneg %p104
        %p216 = pneg %p133
        %p217 = pneg %p130
        %s218 = sand.u32 %s120, 1
        %s219 = scalar_lea.sflag [#allocation4], %s218
        %s220 = sand.u32 %s120, 1
        %s221 = smul.addr %s220, 8
        %s222 = scalar_lea.vmem [#allocation3], %s221
        %p223 = pneg %p159
        %p224 = pneg %p156
        %s225 = sand.u32 %s146, 1
        %s226 = scalar_lea.sflag [#allocation6], %s225
        %s227 = sand.u32 %s146, 1
        %s228 = smul.addr %s227, 8
        %s229 = scalar_lea.vmem [#allocation5], %s228
        %s230 = smul.u32 8, %s23
        %p231 = scmp.lt.s32.totalorder %s230, 15
        %s232 = scalar_select %p231, %s230, 15
        %s233 = smul.addr %s232, 8
        %s234 = scalar_lea.vmem %s0, %s233
        %s235 = smul.u32 8, %s23
        %v237 = vld [vmem:[%s234] sm:$0xff]
        %v238 = vld [vmem:[%s234 + $0x8] sm:$0xff]
        %v239 = vld [vmem:[%s234 + $0x10] sm:$0xff]
        %v240 = vld [vmem:[%s234 + $0x18] sm:$0xff]
        %v241 = vld [vmem:[%s234 + $0x20] sm:$0xff]
        %v242 = vld [vmem:[%s234 + $0x28] sm:$0xff]
        %v243 = vld [vmem:[%s234 + $0x30] sm:$0xff]
        %v244 = vld [vmem:[%s234 + $0x38] sm:$0xff]
        %v245 = vlaneseq
        %v246 = vand.u32 %v245, 127
        %247 = vset.pattern.permute.xlu0 0
        %248 = vperm.xlu0 %247, %v237
        %v249 = vpop.permute.xlu0 %248
        %250 = vset.pattern.permute.xlu0 0
        %251 = vperm.xlu0 %250, %v238
        %v252 = vpop.permute.xlu0 %251
        %253 = vset.pattern.permute.xlu0 0
        %254 = vperm.xlu0 %253, %v239
        %v255 = vpop.permute.xlu0 %254
        %256 = vset.pattern.permute.xlu0 0
        %257 = vperm.xlu0 %256, %v240
        %v258 = vpop.permute.xlu0 %257
        %259 = vset.pattern.permute.xlu0 0
        %260 = vperm.xlu0 %259, %v241
        %v261 = vpop.permute.xlu0 %260
        %262 = vset.pattern.permute.xlu0 0
        %263 = vperm.xlu0 %262, %v242
        %v264 = vpop.permute.xlu0 %263
        %265 = vset.pattern.permute.xlu0 0
        %266 = vperm.xlu0 %265, %v243
        %v267 = vpop.permute.xlu0 %266
        %268 = vset.pattern.permute.xlu0 0
        %269 = vperm.xlu0 %268, %v244
        %v270 = vpop.permute.xlu0 %269
        %vm271 = vcmp.eq.s32.totalorder %v246, %v249
        %vm272 = vcmp.eq.s32.totalorder %v246, %v252
        %vm273 = vcmp.eq.s32.totalorder %v246, %v255
        %vm274 = vcmp.eq.s32.totalorder %v246, %v258
        %vm275 = vcmp.eq.s32.totalorder %v246, %v261
        %vm276 = vcmp.eq.s32.totalorder %v246, %v264
        %vm277 = vcmp.eq.s32.totalorder %v246, %v267
        %vm278 = vcmp.eq.s32.totalorder %v246, %v270
        %v279 = vsel %vm271, 1, 0
        %v280 = vsel %vm272, 1, 0
        %v281 = vsel %vm273, 1, 0
        %v282 = vsel %vm274, 1, 0
        %v283 = vsel %vm275, 1, 0
        %v284 = vsel %vm276, 1, 0
        %v285 = vsel %vm277, 1, 0
        %v286 = vsel %vm278, 1, 0
        %v287 = vcvt.s32.f32 %v279
        %v288 = vcvt.s32.f32 %v280
        %v289 = vcvt.s32.f32 %v281
        %v290 = vcvt.s32.f32 %v282
        %v291 = vcvt.s32.f32 %v283
        %v292 = vcvt.s32.f32 %v284
        %v293 = vcvt.s32.f32 %v285
        %v294 = vcvt.s32.f32 %v286
        %v295 = vld [vmem:[%s1] sm:$0xff]
        %v296 = vld [vmem:[%s1 + $0x8] sm:$0xff]
        %v297 = vld [vmem:[%s3] sm:$0x1]
        %v299 = vlaneseq
        %v300 = vshrl.u32 %v299, 7
        %v301 = vsub.s32 0, %v300
        %v302 = vrot.slane %v297, %v301
        %vm304 = vcmask 130048
        %v306 = vsel %vm304, %v287, 0
        %v309 = vsel %vm304, %v288, 0
        %v312 = vsel %vm304, %v289, 0
        %v315 = vsel %vm304, %v290, 0
        %v318 = vsel %vm304, %v291, 0
        %v321 = vsel %vm304, %v292, 0
        %v324 = vsel %vm304, %v293, 0
        %v327 = vsel %vm304, %v294, 0
        %329 = vmatprep.subr.mxu0 0.0
        %330 = vmatpush1.msra.mxu0 %v295
        %331 = vmatprep.subr.mxu0 0.0
        %332 = vmatpush1.msra.mxu0 %v296
        %333 = vmatprep.subr.mxu0 0.0
        %334 = vmatpush1.msra.mxu0 0.0
        %335 = vmatprep.subr.mxu0 0.0
        %336 = vmatpush1.msra.mxu0 0.0
        %337 = vmatprep.subr.mxu0 0.0
        %338 = vmatpush1.msra.mxu0 0.0
        %339 = vmatprep.subr.mxu0 0.0
        %340 = vmatpush1.msra.mxu0 0.0
        %341 = vmatprep.subr.mxu0 0.0
        %342 = vmatpush1.msra.mxu0 0.0
        %343 = vmatprep.subr.mxu0 0.0
        %344 = vmatpush1.msra.mxu0 0.0
        %345 = vmatprep.subr.mxu0 0.0
        %346 = vmatpush1.msra.mxu0 0.0
        %347 = vmatprep.subr.mxu0 0.0
        %348 = vmatpush1.msra.mxu0 0.0
        %349 = vmatprep.subr.mxu0 0.0
        %350 = vmatpush1.msra.mxu0 0.0
        %351 = vmatprep.subr.mxu0 0.0
        %352 = vmatpush1.msra.mxu0 0.0
        %353 = vmatprep.subr.mxu0 0.0
        %354 = vmatpush1.msra.mxu0 0.0
        %355 = vmatprep.subr.mxu0 0.0
        %356 = vmatpush1.msra.mxu0 0.0
        %357 = vmatprep.subr.mxu0 0.0
        %358 = vmatpush1.msra.mxu0 0.0
        %359 = vmatprep.subr.mxu0 0.0
        %360 = vmatpush1.msra.mxu0 0.0
        %361 = vmatprep.subr.mxu0 0.0
        %362 = vmatpush1.msra.mxu0 0.0
        %363 = vmatprep.subr.mxu0 0.0
        %364 = vmatpush1.msra.mxu0 0.0
        %365 = vmatprep.subr.mxu0 0.0
        %366 = vmatpush1.msra.mxu0 0.0
        %367 = vmatprep.subr.mxu0 0.0
        %368 = vmatpush1.msra.mxu0 0.0
        %369 = vmatprep.subr.mxu0 0.0
        %370 = vmatpush1.msra.mxu0 0.0
        %371 = vmatprep.subr.mxu0 0.0
        %372 = vmatpush1.msra.mxu0 0.0
        %373 = vmatprep.subr.mxu0 0.0
        %374 = vmatpush1.msra.mxu0 0.0
        %375 = vmatprep.subr.mxu0 0.0
        %376 = vmatpush1.msra.mxu0 0.0
        %377 = vmatprep.subr.mxu0 0.0
        %378 = vmatpush1.msra.mxu0 0.0
        %379 = vmatprep.subr.mxu0 0.0
        %380 = vmatpush1.msra.mxu0 0.0
        %381 = vmatprep.subr.mxu0 0.0
        %382 = vmatpush1.msra.mxu0 0.0
        %383 = vmatprep.subr.mxu0 0.0
        %384 = vmatpush1.msra.mxu0 0.0
        %385 = vmatprep.subr.mxu0 0.0
        %386 = vmatpush1.msra.mxu0 0.0
        %387 = vmatprep.subr.mxu0 0.0
        %388 = vmatpush1.msra.mxu0 0.0
        %389 = vmatprep.subr.mxu0 0.0
        %390 = vmatpush1.msra.mxu0 0.0
        %391 = vmatprep.subr.mxu0 0.0
        %392 = vmatpush1.msra.mxu0 0.0
        %393 = vmatprep.mubr.f32.mxu0 0.0
        %394 = vmatmul.mubr.f32.gmra.mrb[0].mxu0 %v306
        %v395 = vpop.f32.mrb[0].mxu0
        %v396 = vadd.f32 %v302, %v395
        %v397 = vpop.f32.mrb[0].mxu0
        %398 = vmatprep.mubr.f32.mxu0 0.0
        %399 = vmatmul.mubr.f32.gmra.mrb[0].mxu0 %v309
        %v400 = vpop.f32.mrb[0].mxu0
        %v401 = vadd.f32 %v302, %v400
        %v402 = vpop.f32.mrb[0].mxu0
        %403 = vmatprep.mubr.f32.mxu0 0.0
        %404 = vmatmul.mubr.f32.gmra.mrb[0].mxu0 %v312
        %v405 = vpop.f32.mrb[0].mxu0
        %v406 = vadd.f32 %v302, %v405
        %v407 = vpop.f32.mrb[0].mxu0
        %408 = vmatprep.mubr.f32.mxu0 0.0
        %409 = vmatmul.mubr.f32.gmra.mrb[0].mxu0 %v315
        %v410 = vpop.f32.mrb[0].mxu0
        %v411 = vadd.f32 %v302, %v410
        %v412 = vpop.f32.mrb[0].mxu0
        %413 = vmatprep.mubr.f32.mxu0 0.0
        %414 = vmatmul.mubr.f32.gmra.mrb[0].mxu0 %v318
        %v415 = vpop.f32.mrb[0].mxu0
        %v416 = vadd.f32 %v302, %v415
        %v417 = vpop.f32.mrb[0].mxu0
        %418 = vmatprep.mubr.f32.mxu0 0.0
        %419 = vmatmul.mubr.f32.gmra.mrb[0].mxu0 %v321
        %v420 = vpop.f32.mrb[0].mxu0
        %v421 = vadd.f32 %v302, %v420
        %v422 = vpop.f32.mrb[0].mxu0
        %423 = vmatprep.mubr.f32.mxu0 0.0
        %424 = vmatmul.mubr.f32.gmra.mrb[0].mxu0 %v324
        %v425 = vpop.f32.mrb[0].mxu0
        %v426 = vadd.f32 %v302, %v425
        %v427 = vpop.f32.mrb[0].mxu0
        %428 = vmatprep.mubr.f32.mxu0 0.0
        %429 = vmatmul.mubr.f32.gmra.mrb[0].mxu0 %v327
        %v430 = vpop.f32.mrb[0].mxu0
        %v431 = vadd.f32 %v302, %v430
        %v432 = vpop.f32.mrb[0].mxu0
        %433 = vdwg.mxu0
        %434 = vst [vmem:[#allocation2] sm:$0xff] %v396
        %435 = vst [vmem:[#allocation2 + $0x8] sm:$0xff] %v401
        %436 = vst [vmem:[#allocation2 + $0x10] sm:$0xff] %v406
        %437 = vst [vmem:[#allocation2 + $0x18] sm:$0xff] %v411
        %438 = vst [vmem:[#allocation2 + $0x20] sm:$0xff] %v416
        %439 = vst [vmem:[#allocation2 + $0x28] sm:$0xff] %v421
        %440 = vst [vmem:[#allocation2 + $0x30] sm:$0xff] %v426
        %441 = vst [vmem:[#allocation2 + $0x38] sm:$0xff] %v431
        %v442 = vld [vmem:[%s2] sm:$0xf]
        %v443 = vld [vmem:[%s2 + $0x4] sm:$0xf]
        %v444 = vld [vmem:[%s2 + $0x8] sm:$0xf]
        %v445 = vld [vmem:[%s2 + $0xc] sm:$0xf]
        %v446 = vld [vmem:[#allocation2] sm:$0xff]
        %v451 = vunpack.c.l.b16 %v442
        %v452 = vunpack.c.l.b16 %v443
        %v453 = vunpack.c.l.b16 %v444
        %v454 = vunpack.c.l.b16 %v445
        %v455 = vpack.c.b16 %v452, %v451
        %v456 = vpack.c.b16 %v454, %v453
        %vm459 = vcmask 261120
        %v461 = vsel %vm459, 0, 0
        %463 = vmatprep.subr.bf16.mxu0 0
        %464 = vmatpush1.bf16.msra.mxu0 %v455
        %465 = vmatprep.subr.bf16.mxu0 0
        %466 = vmatpush1.bf16.msra.mxu0 %v456
        %467 = vmatprep.subr.bf16.mxu0 0
        %468 = vmatpush1.bf16.msra.mxu0 0
        %469 = vmatprep.subr.bf16.mxu0 0
        %470 = vmatpush1.bf16.msra.mxu0 0
        %471 = vmatprep.subr.bf16.mxu0 0
        %472 = vmatpush1.bf16.msra.mxu0 0
        %473 = vmatprep.subr.bf16.mxu0 0
        %474 = vmatpush1.bf16.msra.mxu0 0
        %475 = vmatprep.subr.bf16.mxu0 0
        %476 = vmatpush1.bf16.msra.mxu0 0
        %477 = vmatprep.subr.bf16.mxu0 0
        %478 = vmatpush1.bf16.msra.mxu0 0
        %479 = vmatprep.subr.bf16.mxu0 0
        %480 = vmatpush1.bf16.msra.mxu0 0
        %481 = vmatprep.subr.bf16.mxu0 0
        %482 = vmatpush1.bf16.msra.mxu0 0
        %483 = vmatprep.subr.bf16.mxu0 0
        %484 = vmatpush1.bf16.msra.mxu0 0
        %485 = vmatprep.subr.bf16.mxu0 0
        %486 = vmatpush1.bf16.msra.mxu0 0
        %487 = vmatprep.subr.bf16.mxu0 0
        %488 = vmatpush1.bf16.msra.mxu0 0
        %489 = vmatprep.subr.bf16.mxu0 0
        %490 = vmatpush1.bf16.msra.mxu0 0
        %491 = vmatprep.subr.bf16.mxu0 0
        %492 = vmatpush1.bf16.msra.mxu0 0
        %493 = vmatprep.subr.bf16.mxu0 0
        %494 = vmatpush1.bf16.msra.mxu0 0
        %495 = vmatprep.mubr.bf16.mxu0 0
        %496 = vmatmul.mubr.bf16.gmra.mrb[0].mxu0 %v461
        %v497 = vpop.f32.mrb[0].mxu0
        %v498 = vadd.f32 0.0, %v497
        %v499 = vpop.f32.mrb[0].mxu0
        %v500 = vpop.f32.mrb[0].mxu0
        %v501 = vpop.f32.mrb[0].mxu0
        %502 = vdwg.mxu0
        %v503 = vadd.f32 %v446, %v498
        %v504 = vxor.u32 %v503, 2147483648
        %v505 = vmul.f32 %v504, 1.442695
        %v506 = vpow.pop %v505
        %v507 = vadd.f32 %v506, 1.0
        %v508 = vrcp.pop %v507
        %v509 = vmul.f32 1.0, %v508
        %v510 = vmul.f32 %v509, 0.0
        %v511 = vtanh.pop %v503
        %513 = vrot.lane.b32.xlu0 %v511, 64
        %v514 = vpop.permute.xlu0 %513
        %v516 = vmul.f32 %v509, %v514
        %518 = vrot.lane.b32.xlu0 %v516, 32
        %v519 = vpop.permute.xlu0 %518
        %v521 = vadd.f32 %v510, %v519
        %v522 = vtanh.pop %v521
        %524 = vrot.lane.b32.xlu0 %v522, 64
        %v525 = vpop.permute.xlu0 %524
        %v527 = vmul.f32 %v509, %v525
        %s528 = scalar_lea.vmem [#allocation2], 8
        %v529 = vld [vmem:[%s528] sm:$0xff]
        %v530 = vpack.c.bf16 %v527, %v527
        %532 = vrot.lane.b32.xlu0 %v530, 32
        %v533 = vpop.permute.xlu0 %532
        %v535 = vsel %vm459, %v533, 0
        %537 = vmatprep.subr.bf16.mxu0 0
        %538 = vmatpush1.bf16.msra.mxu0 %v455
        %539 = vmatprep.subr.bf16.mxu0 0
        %540 = vmatpush1.bf16.msra.mxu0 %v456
        %541 = vmatprep.subr.bf16.mxu0 0
        %542 = vmatpush1.bf16.msra.mxu0 0
        %543 = vmatprep.subr.bf16.mxu0 0
        %544 = vmatpush1.bf16.msra.mxu0 0
        %545 = vmatprep.subr.bf16.mxu0 0
        %546 = vmatpush1.bf16.msra.mxu0 0
        %547 = vmatprep.subr.bf16.mxu0 0
        %548 = vmatpush1.bf16.msra.mxu0 0
        %549 = vmatprep.subr.bf16.mxu0 0
        %550 = vmatpush1.bf16.msra.mxu0 0
        %551 = vmatprep.subr.bf16.mxu0 0
        %552 = vmatpush1.bf16.msra.mxu0 0
        %553 = vmatprep.subr.bf16.mxu0 0
        %554 = vmatpush1.bf16.msra.mxu0 0
        %555 = vmatprep.subr.bf16.mxu0 0
        %556 = vmatpush1.bf16.msra.mxu0 0
        %557 = vmatprep.subr.bf16.mxu0 0
        %558 = vmatpush1.bf16.msra.mxu0 0
        %559 = vmatprep.subr.bf16.mxu0 0
        %560 = vmatpush1.bf16.msra.mxu0 0
        %561 = vmatprep.subr.bf16.mxu0 0
        %562 = vmatpush1.bf16.msra.mxu0 0
        %563 = vmatprep.subr.bf16.mxu0 0
        %564 = vmatpush1.bf16.msra.mxu0 0
        %565 = vmatprep.subr.bf16.mxu0 0
        %566 = vmatpush1.bf16.msra.mxu0 0
        %567 = vmatprep.subr.bf16.mxu0 0
        %568 = vmatpush1.bf16.msra.mxu0 0
        %569 = vmatprep.mubr.bf16.mxu0 0
        %570 = vmatmul.mubr.bf16.gmra.mrb[0].mxu0 %v535
        %v571 = vpop.f32.mrb[0].mxu0
        %v572 = vadd.f32 0.0, %v571
        %v573 = vpop.f32.mrb[0].mxu0
        %v574 = vpop.f32.mrb[0].mxu0
        %v575 = vpop.f32.mrb[0].mxu0
        %576 = vdwg.mxu0
        %v577 = vadd.f32 %v529, %v572
        %v578 = vxor.u32 %v577, 2147483648
        %v579 = vmul.f32 %v578, 1.442695
        %v580 = vpow.pop %v579
        %v581 = vadd.f32 %v580, 1.0
        %v582 = vrcp.pop %v581
        %v583 = vmul.f32 1.0, %v582
        %v584 = vmul.f32 %v583, %v521
        %v585 = vtanh.pop %v577
        %587 = vrot.lane.b32.xlu0 %v585, 64
        %v588 = vpop.permute.xlu0 %587
        %v590 = vmul.f32 %v583, %v588
        %592 = vrot.lane.b32.xlu0 %v590, 32
        %v593 = vpop.permute.xlu0 %592
        %v595 = vadd.f32 %v584, %v593
        %v596 = vtanh.pop %v595
        %598 = vrot.lane.b32.xlu0 %v596, 64
        %v599 = vpop.permute.xlu0 %598
        %v601 = vmul.f32 %v583, %v599
        %s602 = scalar_lea.vmem [#allocation2], 16
        %v603 = vld [vmem:[%s602] sm:$0xff]
        %v604 = vpack.c.bf16 %v601, %v601
        %606 = vrot.lane.b32.xlu0 %v604, 32
        %v607 = vpop.permute.xlu0 %606
        %v609 = vsel %vm459, %v607, 0
        %611 = vmatprep.subr.bf16.mxu0 0
        %612 = vmatpush1.bf16.msra.mxu0 %v455
        %613 = vmatprep.subr.bf16.mxu0 0
        %614 = vmatpush1.bf16.msra.mxu0 %v456
        %615 = vmatprep.subr.bf16.mxu0 0
        %616 = vmatpush1.bf16.msra.mxu0 0
        %617 = vmatprep.subr.bf16.mxu0 0
        %618 = vmatpush1.bf16.msra.mxu0 0
        %619 = vmatprep.subr.bf16.mxu0 0
        %620 = vmatpush1.bf16.msra.mxu0 0
        %621 = vmatprep.subr.bf16.mxu0 0
        %622 = vmatpush1.bf16.msra.mxu0 0
        %623 = vmatprep.subr.bf16.mxu0 0
        %624 = vmatpush1.bf16.msra.mxu0 0
        %625 = vmatprep.subr.bf16.mxu0 0
        %626 = vmatpush1.bf16.msra.mxu0 0
        %627 = vmatprep.subr.bf16.mxu0 0
        %628 = vmatpush1.bf16.msra.mxu0 0
        %629 = vmatprep.subr.bf16.mxu0 0
        %630 = vmatpush1.bf16.msra.mxu0 0
        %631 = vmatprep.subr.bf16.mxu0 0
        %632 = vmatpush1.bf16.msra.mxu0 0
        %633 = vmatprep.subr.bf16.mxu0 0
        %634 = vmatpush1.bf16.msra.mxu0 0
        %635 = vmatprep.subr.bf16.mxu0 0
        %636 = vmatpush1.bf16.msra.mxu0 0
        %637 = vmatprep.subr.bf16.mxu0 0
        %638 = vmatpush1.bf16.msra.mxu0 0
        %639 = vmatprep.subr.bf16.mxu0 0
        %640 = vmatpush1.bf16.msra.mxu0 0
        %641 = vmatprep.subr.bf16.mxu0 0
        %642 = vmatpush1.bf16.msra.mxu0 0
        %643 = vmatprep.mubr.bf16.mxu0 0
        %644 = vmatmul.mubr.bf16.gmra.mrb[0].mxu0 %v609
        %v645 = vpop.f32.mrb[0].mxu0
        %v646 = vadd.f32 0.0, %v645
        %v647 = vpop.f32.mrb[0].mxu0
        %v648 = vpop.f32.mrb[0].mxu0
        %v649 = vpop.f32.mrb[0].mxu0
        %650 = vdwg.mxu0
        %v651 = vadd.f32 %v603, %v646
        %v652 = vxor.u32 %v651, 2147483648
        %v653 = vmul.f32 %v652, 1.442695
        %v654 = vpow.pop %v653
        %v655 = vadd.f32 %v654, 1.0
        %v656 = vrcp.pop %v655
        %v657 = vmul.f32 1.0, %v656
        %v658 = vmul.f32 %v657, %v595
        %v659 = vtanh.pop %v651
        %661 = vrot.lane.b32.xlu0 %v659, 64
        %v662 = vpop.permute.xlu0 %661
        %v664 = vmul.f32 %v657, %v662
        %666 = vrot.lane.b32.xlu0 %v664, 32
        %v667 = vpop.permute.xlu0 %666
        %v669 = vadd.f32 %v658, %v667
        %v670 = vtanh.pop %v669
        %672 = vrot.lane.b32.xlu0 %v670, 64
        %v673 = vpop.permute.xlu0 %672
        %v675 = vmul.f32 %v657, %v673
        %s676 = scalar_lea.vmem [#allocation2], 24
        %v677 = vld [vmem:[%s676] sm:$0xff]
        %v678 = vpack.c.bf16 %v675, %v675
        %680 = vrot.lane.b32.xlu0 %v678, 32
        %v681 = vpop.permute.xlu0 %680
        %v683 = vsel %vm459, %v681, 0
        %685 = vmatprep.subr.bf16.mxu0 0
        %686 = vmatpush1.bf16.msra.mxu0 %v455
        %687 = vmatprep.subr.bf16.mxu0 0
        %688 = vmatpush1.bf16.msra.mxu0 %v456
        %689 = vmatprep.subr.bf16.mxu0 0
        %690 = vmatpush1.bf16.msra.mxu0 0
        %691 = vmatprep.subr.bf16.mxu0 0
        %692 = vmatpush1.bf16.msra.mxu0 0
        %693 = vmatprep.subr.bf16.mxu0 0
        %694 = vmatpush1.bf16.msra.mxu0 0
        %695 = vmatprep.subr.bf16.mxu0 0
        %696 = vmatpush1.bf16.msra.mxu0 0
        %697 = vmatprep.subr.bf16.mxu0 0
        %698 = vmatpush1.bf16.msra.mxu0 0
        %699 = vmatprep.subr.bf16.mxu0 0
        %700 = vmatpush1.bf16.msra.mxu0 0
        %701 = vmatprep.subr.bf16.mxu0 0
        %702 = vmatpush1.bf16.msra.mxu0 0
        %703 = vmatprep.subr.bf16.mxu0 0
        %704 = vmatpush1.bf16.msra.mxu0 0
        %705 = vmatprep.subr.bf16.mxu0 0
        %706 = vmatpush1.bf16.msra.mxu0 0
        %707 = vmatprep.subr.bf16.mxu0 0
        %708 = vmatpush1.bf16.msra.mxu0 0
        %709 = vmatprep.subr.bf16.mxu0 0
        %710 = vmatpush1.bf16.msra.mxu0 0
        %711 = vmatprep.subr.bf16.mxu0 0
        %712 = vmatpush1.bf16.msra.mxu0 0
        %713 = vmatprep.subr.bf16.mxu0 0
        %714 = vmatpush1.bf16.msra.mxu0 0
        %715 = vmatprep.subr.bf16.mxu0 0
        %716 = vmatpush1.bf16.msra.mxu0 0
        %717 = vmatprep.mubr.bf16.mxu0 0
        %718 = vmatmul.mubr.bf16.gmra.mrb[0].mxu0 %v683
        %v719 = vpop.f32.mrb[0].mxu0
        %v720 = vadd.f32 0.0, %v719
        %v721 = vpop.f32.mrb[0].mxu0
        %v722 = vpop.f32.mrb[0].mxu0
        %v723 = vpop.f32.mrb[0].mxu0
        %724 = vdwg.mxu0
        %v725 = vadd.f32 %v677, %v720
        %v726 = vxor.u32 %v725, 2147483648
        %v727 = vmul.f32 %v726, 1.442695
        %v728 = vpow.pop %v727
        %v729 = vadd.f32 %v728, 1.0
        %v730 = vrcp.pop %v729
        %v731 = vmul.f32 1.0, %v730
        %v732 = vmul.f32 %v731, %v669
        %v733 = vtanh.pop %v725
        %735 = vrot.lane.b32.xlu0 %v733, 64
        %v736 = vpop.permute.xlu0 %735
        %v738 = vmul.f32 %v731, %v736
        %740 = vrot.lane.b32.xlu0 %v738, 32
        %v741 = vpop.permute.xlu0 %740
        %v743 = vadd.f32 %v732, %v741
        %v744 = vtanh.pop %v743
        %746 = vrot.lane.b32.xlu0 %v744, 64
        %v747 = vpop.permute.xlu0 %746
        %v749 = vmul.f32 %v731, %v747
        %s750 = scalar_lea.vmem [#allocation2], 32
        %v751 = vld [vmem:[%s750] sm:$0xff]
        %v752 = vpack.c.bf16 %v749, %v749
        %754 = vrot.lane.b32.xlu0 %v752, 32
        %v755 = vpop.permute.xlu0 %754
        %v757 = vsel %vm459, %v755, 0
        %759 = vmatprep.subr.bf16.mxu0 0
        %760 = vmatpush1.bf16.msra.mxu0 %v455
        %761 = vmatprep.subr.bf16.mxu0 0
        %762 = vmatpush1.bf16.msra.mxu0 %v456
        %763 = vmatprep.subr.bf16.mxu0 0
        %764 = vmatpush1.bf16.msra.mxu0 0
        %765 = vmatprep.subr.bf16.mxu0 0
        %766 = vmatpush1.bf16.msra.mxu0 0
        %767 = vmatprep.subr.bf16.mxu0 0
        %768 = vmatpush1.bf16.msra.mxu0 0
        %769 = vmatprep.subr.bf16.mxu0 0
        %770 = vmatpush1.bf16.msra.mxu0 0
        %771 = vmatprep.subr.bf16.mxu0 0
        %772 = vmatpush1.bf16.msra.mxu0 0
        %773 = vmatprep.subr.bf16.mxu0 0
        %774 = vmatpush1.bf16.msra.mxu0 0
        %775 = vmatprep.subr.bf16.mxu0 0
        %776 = vmatpush1.bf16.msra.mxu0 0
        %777 = vmatprep.subr.bf16.mxu0 0
        %778 = vmatpush1.bf16.msra.mxu0 0
        %779 = vmatprep.subr.bf16.mxu0 0
        %780 = vmatpush1.bf16.msra.mxu0 0
        %781 = vmatprep.subr.bf16.mxu0 0
        %782 = vmatpush1.bf16.msra.mxu0 0
        %783 = vmatprep.subr.bf16.mxu0 0
        %784 = vmatpush1.bf16.msra.mxu0 0
        %785 = vmatprep.subr.bf16.mxu0 0
        %786 = vmatpush1.bf16.msra.mxu0 0
        %787 = vmatprep.subr.bf16.mxu0 0
        %788 = vmatpush1.bf16.msra.mxu0 0
        %789 = vmatprep.subr.bf16.mxu0 0
        %790 = vmatpush1.bf16.msra.mxu0 0
        %791 = vmatprep.mubr.bf16.mxu0 0
        %792 = vmatmul.mubr.bf16.gmra.mrb[0].mxu0 %v757
        %v793 = vpop.f32.mrb[0].mxu0
        %v794 = vadd.f32 0.0, %v793
        %v795 = vpop.f32.mrb[0].mxu0
        %v796 = vpop.f32.mrb[0].mxu0
        %v797 = vpop.f32.mrb[0].mxu0
        %798 = vdwg.mxu0
        %v799 = vadd.f32 %v751, %v794
        %v800 = vxor.u32 %v799, 2147483648
        %v801 = vmul.f32 %v800, 1.442695
        %v802 = vpow.pop %v801
        %v803 = vadd.f32 %v802, 1.0
        %v804 = vrcp.pop %v803
        %v805 = vmul.f32 1.0, %v804
        %v806 = vmul.f32 %v805, %v743
        %v807 = vtanh.pop %v799
        %809 = vrot.lane.b32.xlu0 %v807, 64
        %v810 = vpop.permute.xlu0 %809
        %v812 = vmul.f32 %v805, %v810
        %814 = vrot.lane.b32.xlu0 %v812, 32
        %v815 = vpop.permute.xlu0 %814
        %v817 = vadd.f32 %v806, %v815
        %v818 = vtanh.pop %v817
        %820 = vrot.lane.b32.xlu0 %v818, 64
        %v821 = vpop.permute.xlu0 %820
        %v823 = vmul.f32 %v805, %v821
        %s824 = scalar_lea.vmem [#allocation2], 40
        %v825 = vld [vmem:[%s824] sm:$0xff]
        %v826 = vpack.c.bf16 %v823, %v823
        %828 = vrot.lane.b32.xlu0 %v826, 32
        %v829 = vpop.permute.xlu0 %828
        %v831 = vsel %vm459, %v829, 0
        %833 = vmatprep.subr.bf16.mxu0 0
        %834 = vmatpush1.bf16.msra.mxu0 %v455
        %835 = vmatprep.subr.bf16.mxu0 0
        %836 = vmatpush1.bf16.msra.mxu0 %v456
        %837 = vmatprep.subr.bf16.mxu0 0
        %838 = vmatpush1.bf16.msra.mxu0 0
        %839 = vmatprep.subr.bf16.mxu0 0
        %840 = vmatpush1.bf16.msra.mxu0 0
        %841 = vmatprep.subr.bf16.mxu0 0
        %842 = vmatpush1.bf16.msra.mxu0 0
        %843 = vmatprep.subr.bf16.mxu0 0
        %844 = vmatpush1.bf16.msra.mxu0 0
        %845 = vmatprep.subr.bf16.mxu0 0
        %846 = vmatpush1.bf16.msra.mxu0 0
        %847 = vmatprep.subr.bf16.mxu0 0
        %848 = vmatpush1.bf16.msra.mxu0 0
        %849 = vmatprep.subr.bf16.mxu0 0
        %850 = vmatpush1.bf16.msra.mxu0 0
        %851 = vmatprep.subr.bf16.mxu0 0
        %852 = vmatpush1.bf16.msra.mxu0 0
        %853 = vmatprep.subr.bf16.mxu0 0
        %854 = vmatpush1.bf16.msra.mxu0 0
        %855 = vmatprep.subr.bf16.mxu0 0
        %856 = vmatpush1.bf16.msra.mxu0 0
        %857 = vmatprep.subr.bf16.mxu0 0
        %858 = vmatpush1.bf16.msra.mxu0 0
        %859 = vmatprep.subr.bf16.mxu0 0
        %860 = vmatpush1.bf16.msra.mxu0 0
        %861 = vmatprep.subr.bf16.mxu0 0
        %862 = vmatpush1.bf16.msra.mxu0 0
        %863 = vmatprep.subr.bf16.mxu0 0
        %864 = vmatpush1.bf16.msra.mxu0 0
        %865 = vmatprep.mubr.bf16.mxu0 0
        %866 = vmatmul.mubr.bf16.gmra.mrb[0].mxu0 %v831
        %v867 = vpop.f32.mrb[0].mxu0
        %v868 = vadd.f32 0.0, %v867
        %v869 = vpop.f32.mrb[0].mxu0
        %v870 = vpop.f32.mrb[0].mxu0
        %v871 = vpop.f32.mrb[0].mxu0
        %872 = vdwg.mxu0
        %v873 = vadd.f32 %v825, %v868
        %v874 = vxor.u32 %v873, 2147483648
        %v875 = vmul.f32 %v874, 1.442695
        %v876 = vpow.pop %v875
        %v877 = vadd.f32 %v876, 1.0
        %v878 = vrcp.pop %v877
        %v879 = vmul.f32 1.0, %v878
        %v880 = vmul.f32 %v879, %v817
        %v881 = vtanh.pop %v873
        %883 = vrot.lane.b32.xlu0 %v881, 64
        %v884 = vpop.permute.xlu0 %883
        %v886 = vmul.f32 %v879, %v884
        %888 = vrot.lane.b32.xlu0 %v886, 32
        %v889 = vpop.permute.xlu0 %888
        %v891 = vadd.f32 %v880, %v889
        %v892 = vtanh.pop %v891
        %894 = vrot.lane.b32.xlu0 %v892, 64
        %v895 = vpop.permute.xlu0 %894
        %v897 = vmul.f32 %v879, %v895
        %s898 = scalar_lea.vmem [#allocation2], 48
        %v899 = vld [vmem:[%s898] sm:$0xff]
        %v900 = vpack.c.bf16 %v897, %v897
        %902 = vrot.lane.b32.xlu0 %v900, 32
        %v903 = vpop.permute.xlu0 %902
        %v905 = vsel %vm459, %v903, 0
        %907 = vmatprep.subr.bf16.mxu0 0
        %908 = vmatpush1.bf16.msra.mxu0 %v455
        %909 = vmatprep.subr.bf16.mxu0 0
        %910 = vmatpush1.bf16.msra.mxu0 %v456
        %911 = vmatprep.subr.bf16.mxu0 0
        %912 = vmatpush1.bf16.msra.mxu0 0
        %913 = vmatprep.subr.bf16.mxu0 0
        %914 = vmatpush1.bf16.msra.mxu0 0
        %915 = vmatprep.subr.bf16.mxu0 0
        %916 = vmatpush1.bf16.msra.mxu0 0
        %917 = vmatprep.subr.bf16.mxu0 0
        %918 = vmatpush1.bf16.msra.mxu0 0
        %919 = vmatprep.subr.bf16.mxu0 0
        %920 = vmatpush1.bf16.msra.mxu0 0
        %921 = vmatprep.subr.bf16.mxu0 0
        %922 = vmatpush1.bf16.msra.mxu0 0
        %923 = vmatprep.subr.bf16.mxu0 0
        %924 = vmatpush1.bf16.msra.mxu0 0
        %925 = vmatprep.subr.bf16.mxu0 0
        %926 = vmatpush1.bf16.msra.mxu0 0
        %927 = vmatprep.subr.bf16.mxu0 0
        %928 = vmatpush1.bf16.msra.mxu0 0
        %929 = vmatprep.subr.bf16.mxu0 0
        %930 = vmatpush1.bf16.msra.mxu0 0
        %931 = vmatprep.subr.bf16.mxu0 0
        %932 = vmatpush1.bf16.msra.mxu0 0
        %933 = vmatprep.subr.bf16.mxu0 0
        %934 = vmatpush1.bf16.msra.mxu0 0
        %935 = vmatprep.subr.bf16.mxu0 0
        %936 = vmatpush1.bf16.msra.mxu0 0
        %937 = vmatprep.subr.bf16.mxu0 0
        %938 = vmatpush1.bf16.msra.mxu0 0
        %939 = vmatprep.mubr.bf16.mxu0 0
        %940 = vmatmul.mubr.bf16.gmra.mrb[0].mxu0 %v905
        %v941 = vpop.f32.mrb[0].mxu0
        %v942 = vadd.f32 0.0, %v941
        %v943 = vpop.f32.mrb[0].mxu0
        %v944 = vpop.f32.mrb[0].mxu0
        %v945 = vpop.f32.mrb[0].mxu0
        %946 = vdwg.mxu0
        %v947 = vadd.f32 %v899, %v942
        %v948 = vxor.u32 %v947, 2147483648
        %v949 = vmul.f32 %v948, 1.442695
        %v950 = vpow.pop %v949
        %v951 = vadd.f32 %v950, 1.0
        %v952 = vrcp.pop %v951
        %v953 = vmul.f32 1.0, %v952
        %v954 = vmul.f32 %v953, %v891
        %v955 = vtanh.pop %v947
        %957 = vrot.lane.b32.xlu0 %v955, 64
        %v958 = vpop.permute.xlu0 %957
        %v960 = vmul.f32 %v953, %v958
        %962 = vrot.lane.b32.xlu0 %v960, 32
        %v963 = vpop.permute.xlu0 %962
        %v965 = vadd.f32 %v954, %v963
        %v966 = vtanh.pop %v965
        %968 = vrot.lane.b32.xlu0 %v966, 64
        %v969 = vpop.permute.xlu0 %968
        %v971 = vmul.f32 %v953, %v969
        %s972 = scalar_lea.vmem [#allocation2], 56
        %v973 = vld [vmem:[%s972] sm:$0xff]
        %v974 = vpack.c.bf16 %v971, %v971
        %976 = vrot.lane.b32.xlu0 %v974, 32
        %v977 = vpop.permute.xlu0 %976
        %v979 = vsel %vm459, %v977, 0
        %981 = vmatprep.subr.bf16.mxu0 0
        %982 = vmatpush1.bf16.msra.mxu0 %v455
        %983 = vmatprep.subr.bf16.mxu0 0
        %984 = vmatpush1.bf16.msra.mxu0 %v456
        %985 = vmatprep.subr.bf16.mxu0 0
        %986 = vmatpush1.bf16.msra.mxu0 0
        %987 = vmatprep.subr.bf16.mxu0 0
        %988 = vmatpush1.bf16.msra.mxu0 0
        %989 = vmatprep.subr.bf16.mxu0 0
        %990 = vmatpush1.bf16.msra.mxu0 0
        %991 = vmatprep.subr.bf16.mxu0 0
        %992 = vmatpush1.bf16.msra.mxu0 0
        %993 = vmatprep.subr.bf16.mxu0 0
        %994 = vmatpush1.bf16.msra.mxu0 0
        %995 = vmatprep.subr.bf16.mxu0 0
        %996 = vmatpush1.bf16.msra.mxu0 0
        %997 = vmatprep.subr.bf16.mxu0 0
        %998 = vmatpush1.bf16.msra.mxu0 0
        %999 = vmatprep.subr.bf16.mxu0 0
        %1000 = vmatpush1.bf16.msra.mxu0 0
        %1001 = vmatprep.subr.bf16.mxu0 0
        %1002 = vmatpush1.bf16.msra.mxu0 0
        %1003 = vmatprep.subr.bf16.mxu0 0
        %1004 = vmatpush1.bf16.msra.mxu0 0
        %1005 = vmatprep.subr.bf16.mxu0 0
        %1006 = vmatpush1.bf16.msra.mxu0 0
        %1007 = vmatprep.subr.bf16.mxu0 0
        %1008 = vmatpush1.bf16.msra.mxu0 0
        %1009 = vmatprep.subr.bf16.mxu0 0
        %1010 = vmatpush1.bf16.msra.mxu0 0
        %1011 = vmatprep.subr.bf16.mxu0 0
        %1012 = vmatpush1.bf16.msra.mxu0 0
        %1013 = vmatprep.mubr.bf16.mxu0 0
        %1014 = vmatmul.mubr.bf16.gmra.mrb[0].mxu0 %v979
        %v1015 = vpop.f32.mrb[0].mxu0
        %v1016 = vadd.f32 0.0, %v1015
        %v1017 = vpop.f32.mrb[0].mxu0
        %v1018 = vpop.f32.mrb[0].mxu0
        %v1019 = vpop.f32.mrb[0].mxu0
        %1020 = vdwg.mxu0
        %v1021 = vadd.f32 %v973, %v1016
        %v1022 = vxor.u32 %v1021, 2147483648
        %v1023 = vmul.f32 %v1022, 1.442695
        %v1024 = vpow.pop %v1023
        %v1025 = vadd.f32 %v1024, 1.0
        %v1026 = vrcp.pop %v1025
        %v1027 = vmul.f32 1.0, %v1026
        %v1028 = vmul.f32 %v1027, %v965
        %v1029 = vtanh.pop %v1021
        %1031 = vrot.lane.b32.xlu0 %v1029, 64
        %v1032 = vpop.permute.xlu0 %1031
        %v1034 = vmul.f32 %v1027, %v1032
        %1036 = vrot.lane.b32.xlu0 %v1034, 32
        %v1037 = vpop.permute.xlu0 %1036
        %v1039 = vadd.f32 %v1028, %v1037
        %v1040 = vtanh.pop %v1039
        %1042 = vrot.lane.b32.xlu0 %v1040, 64
        %v1043 = vpop.permute.xlu0 %1042
        %v1045 = vmul.f32 %v1027, %v1043
        %1047 = vrot.lane.b32.xlu0 %v1045, 32
        %v1048 = vpop.permute.xlu0 %1047
        %1050 = vst.msk [vmem:[%s222] sm:$0xff] %vm459, %v1048
        %1052 = vrot.lane.b32.xlu0 %v1039, 96
        %v1053 = vpop.permute.xlu0 %1052
        %1055 = vst.msk [vmem:[%s229] sm:$0xff] %vm459, %v1053
        %s1056 = sand.u32 %s120, 1
        %s1057 = scalar_lea.sflag [#allocation4], %s1056
        %s1058 = sand.u32 %s120, 1
        %s1059 = smul.addr %s1058, 8
        %s1060 = scalar_lea.vmem [#allocation3], %s1059
        %s1061 = sand.u32 %s146, 1
        %s1062 = scalar_lea.sflag [#allocation6], %s1061
        %s1063 = sand.u32 %s146, 1
        %s1064 = smul.addr %s1063, 8
        %s1065 = scalar_lea.vmem [#allocation5], %s1064
        // Predicated region
        $region37: #{encoder_forward.1} parent=35 // pred_check
          %p1066 = pneg %p130
        $region38: #{encoder_forward.1} parent=35 // pred_check_branch
          %1068 = sbr.rel (%p1066) target = $region40
        $region39: #{encoder_forward.1} parent=35 // pred_region
          %s1070 = ssub.s32 128, 128
          %1071 = vsyncadd %s1057, %s1070
          %s1072 = smul.addr %s23, 128
          %s1073 = scalar_lea.hbm %s4, %s1072
          %s1075 = sshll.u32 %s1060, 4
          %s1076 = int_to_ptr.vmem [resolvable:$true] %s1075
          %1078 = dma.vmem_to_hbm [thread:$0]  %s1076, 128, %s1073, %s1057
        $region40: #{encoder_forward.1} parent=35 // pred_fallthru
          _
        // Predicated region
        $region41: #{encoder_forward.1} parent=35 // pred_check
          %p1079 = pneg %p156
        $region42: #{encoder_forward.1} parent=35 // pred_check_branch
          %1081 = sbr.rel (%p1079) target = $region44
        $region43: #{encoder_forward.1} parent=35 // pred_region
          %s1083 = ssub.s32 128, 128
          %1084 = vsyncadd %s1062, %s1083
          %s1085 = smul.addr %s23, 128
          %s1086 = scalar_lea.hbm %s5, %s1085
          %s1088 = sshll.u32 %s1065, 4
          %s1089 = int_to_ptr.vmem [resolvable:$true] %s1088
          %1091 = dma.vmem_to_hbm [thread:$0]  %s1089, 128, %s1086, %s1062
        $region44: #{encoder_forward.1} parent=35 // pred_fallthru
          _
      $region36: #{encoder_forward.1} parent=5 // pred_fallthru
        _
      %p1092 = scmp.le.s32.totalorder 2, %s18
      // Predicated region
      $region45: #{encoder_forward.1} parent=5 // pred_check
        %p1093 = pneg %p1092
      $region46: #{encoder_forward.1} parent=5 // pred_check_branch
        %1095 = sbr.rel (%p1093) target = $region48
      $region47: #{encoder_forward.1} parent=5 // pred_region
        %s1096 = ssub.s32 %s18, 2
        // Predicated region
        $region49: #{encoder_forward.1} parent=47 // pred_check
          %p1097 = pneg %p136
        $region50: #{encoder_forward.1} parent=47 // pred_check_branch
          %1099 = sbr.rel (%p1097) target = $region52
        $region51: #{encoder_forward.1} parent=47 // pred_region
          %s1100 = sand.u32 %s121, 1
          %s1101 = scalar_lea.sflag [#allocation4], %s1100
          %s1102 = sand.u32 %s121, 1
          %s1103 = smul.addr %s1102, 8
          %s1104 = scalar_lea.vmem [#allocation3], %s1103
          %1105 = dma.done %s1101, 128
        $region52: #{encoder_forward.1} parent=47 // pred_fallthru
          _
        // Predicated region
        $region53: #{encoder_forward.1} parent=47 // pred_check
          %p1106 = pneg %p162
        $region54: #{encoder_forward.1} parent=47 // pred_check_branch
          %1108 = sbr.rel (%p1106) target = $region56
        $region55: #{encoder_forward.1} parent=47 // pred_region
          %s1109 = sand.u32 %s147, 1
          %s1110 = scalar_lea.sflag [#allocation6], %s1109
          %s1111 = sand.u32 %s147, 1
          %s1112 = smul.addr %s1111, 8
          %s1113 = scalar_lea.vmem [#allocation5], %s1112
          %1114 = dma.done %s1110, 128
        $region56: #{encoder_forward.1} parent=47 // pred_fallthru
          _
      $region48: #{encoder_forward.1} parent=5 // pred_fallthru
        _
    $region6: #{encoder_forward.1} parent=1 // loop_footer
      %s22 = sadd.s32 1, %s18
    $region7: #{encoder_forward.1} parent=1 // loop_footer_branch
      %17 = sbr.rel target = $region3
    $region8: #{encoder_forward.1} parent=1 // loop_exit
      _
    %1115 = vsyncpa [#allocation4], 1
    %s1116 = scalar_lea.sflag [#allocation4], 1
    %1117 = vsyncpa %s1116, 1
    %1118 = vsyncpa [#allocation6], 1
    %s1119 = scalar_lea.sflag [#allocation6], 1
    %1120 = vsyncpa %s1119, 1

</llo_original>
